<compile_context>
chip_gen: v6e
topology: v6e:2x2x1
jax: 0.10.0
libtpu: 0.0.40
codegen_flags: <defaults>
</compile_context>

<pallas_src>
import functools

import jax
import jax.numpy as jnp
from jax.experimental import pallas as pl
from jax.experimental.pallas import tpu as pltpu

LANE = 128      # last-dim (lane) granularity
SUBLANE = 8     # second-to-last (sublane) granularity


def _round_up(x, m):
    return ((x + m - 1) // m) * m


def _cdiv(a, b):
    return -(-a // b)


def _pad_to(a, shape):
    pads = [(0, t - s) for s, t in zip(a.shape, shape)]
    if all(p == (0, 0) for p in pads):
        return a
    return jnp.pad(a, pads)


def mlp_kernel(x_ref, w1_ref, b1_ref, w2_ref, b2_ref, o_ref, xpad_ref,
               *, n_in, n_out):
    # Widen x from n_in (=4) lanes to the full 128-lane MXU width inside VMEM.
    # The scratch is re-zeroed every step (cheap: a handful of vector stores)
    # so correctness does not depend on persistent scratch state, which would
    # break under the megacore "parallel" grid split.
    xpad_ref[...] = jnp.zeros_like(xpad_ref)
    xpad_ref[:, :n_in] = x_ref[...]

    # Layer 1: full-width MXU matmul, f32 accumulation, f32 bias + ReLU.
    h = jnp.dot(xpad_ref[...], w1_ref[...], preferred_element_type=jnp.float32)
    h = jnp.maximum(h + b1_ref[...], 0.0)              # (tb,128) + (1,128)

    # Layer 2: full-width MXU matmul; only the first n_out lanes are valid
    # (padded W2 columns / b2 lanes are zero), slice them for the store.
    y = jnp.dot(h.astype(w2_ref.dtype), w2_ref[...],
                preferred_element_type=jnp.float32)
    y = y + b2_ref[...]
    o_ref[...] = y[:, :n_out].astype(o_ref.dtype)


def neural_network_forward(x, w1, b1, w2, b2, *, block_batch=512,
                           use_bf16=False):
    """relu(x @ W1 + b1) @ W2 + b2 via a batch-tiled Pallas kernel.

    block_batch: target batch-tile size. 512 is a safe, near-roofline default
    on v5e/v6e/v7x (tiles are tiny; weights ~130 KiB stay VMEM-resident).
    For very large batches on v7x, keep batch/block_batch >= ~8 so each of the
    two TensorCores gets >=4 grid steps and DMA stays hidden under compute.

    use_bf16: stream x/W1/W2 as bfloat16 (f32 accumulate, f32 bias/ReLU) to
    halve HBM traffic; not bit-exact vs. an f32 reference.
    """
    batch, n_in = x.shape
    n_units = w1.shape[1]
    n_out = w2.shape[1]

    # Pad only the tiny, grid-invariant feature dims of the weights/biases to
    # full 128-lane width (exact math: padded entries are zero).
    n_in_p = _round_up(n_in, LANE)
    n_units_p = _round_up(n_units, LANE)
    n_out_p = _round_up(n_out, LANE)

    # Batch tiling: num_steps tiles of tb rows each, tb a multiple of 8, so at
    # most ~7 padding rows per step (never a whole extra tile).
    num_steps = max(1, _cdiv(batch, block_batch))
    tb = _round_up(_cdiv(batch, num_steps), SUBLANE)
    batch_p = num_steps * tb
    grid = (num_steps,)

    stream_dtype = jnp.bfloat16 if use_bf16 else x.dtype

    # x streams unpadded on the feature dim (only batch rows padded, if any).
    x_p = _pad_to(x, (batch_p, n_in)).astype(stream_dtype)
    w1_p = _pad_to(w1, (n_in_p, n_units_p)).astype(stream_dtype)
    b1_p = _pad_to(b1.reshape(1, -1), (1, n_units_p)).astype(jnp.float32)
    w2_p = _pad_to(w2, (n_units_p, n_out_p)).astype(stream_dtype)
    b2_p = _pad_to(b2.reshape(1, -1), (1, n_out_p)).astype(jnp.float32)

    # Advisory cost estimate from the *logical* dims.
    itemsize = 2 if use_bf16 else 4
    cost = pl.CostEstimate(
        flops=2 * batch * (n_in * n_units + n_units * n_out),
        bytes_accessed=(itemsize * (batch * n_in + n_in * n_units
                                    + n_units * n_out)
                        + 4 * (n_units + n_out + batch * n_out)),
        transcendentals=0,
    )

    kernel = functools.partial(mlp_kernel, n_in=n_in, n_out=n_out)

    out_p = pl.pallas_call(
        kernel,
        out_shape=jax.ShapeDtypeStruct((batch_p, n_out), jnp.float32),
        grid_spec=pltpu.PrefetchScalarGridSpec(
            num_scalar_prefetch=0,
            grid=grid,
            in_specs=[
                # Streamed per-batch-tile input, unpadded feature dim
                # (double-buffered by Pallas, contiguous in HBM).
                pl.BlockSpec((tb, n_in), lambda i: (i, 0)),
                # Weights/biases: same block every step -> VMEM-resident.
                pl.BlockSpec((n_in_p, n_units_p), lambda i: (0, 0)),
                pl.BlockSpec((1, n_units_p), lambda i: (0, 0)),
                pl.BlockSpec((n_units_p, n_out_p), lambda i: (0, 0)),
                pl.BlockSpec((1, n_out_p), lambda i: (0, 0)),
            ],
            # Narrow (tb, n_out) write-back: ~42x fewer HBM write bytes than a
            # lane-padded store; masked vst is cheap relative to the saved BW.
            out_specs=pl.BlockSpec((tb, n_out), lambda i: (i, 0)),
            scratch_shapes=[pltpu.VMEM((tb, n_in_p), stream_dtype)],
        ),
        compiler_params=pltpu.CompilerParams(
            dimension_semantics=("parallel",),
        ),
        cost_estimate=cost,
    )(x_p, w1_p, b1_p, w2_p, b2_p)

    # Drop padded batch rows (no-op / no copy when batch_p == batch). These
    # rows are NOT zero (they equal relu(b1) @ W2 + b2), so never consume the
    # padded buffer directly.
    if batch_p == batch:
        return out_p
    return out_p[:batch]


def init_params(key, n_in, n_units, n_out):
    # Deterministic init mimicking nn.Linear's U(-1/sqrt(fan_in), 1/sqrt(fan_in)).
    k1, k2, k3, k4 = jax.random.split(key, 4)
    lim1 = 1.0 / jnp.sqrt(jnp.float32(n_in))
    lim2 = 1.0 / jnp.sqrt(jnp.float32(n_units))
    w1 = jax.random.uniform(k1, (n_in, n_units), jnp.float32, -lim1, lim1)
    b1 = jax.random.uniform(k2, (n_units,), jnp.float32, -lim1, lim1)
    w2 = jax.random.uniform(k3, (n_units, n_out), jnp.float32, -lim2, lim2)
    b2 = jax.random.uniform(k4, (n_out,), jnp.float32, -lim2, lim2)
    return w1, b1, w2, b2


if __name__ == "__main__":
    # Shapes consistent with the module: n_in from xtrain.shape[1] (iris-like 4),
    # n_units=10, n_out=3. batch=512 keeps the example small; the default
    # tb=512 gives a single full tile (no padding, no wrapper copies).
    batch, n_in, n_units, n_out = 512, 4, 10, 3

    key = jax.random.PRNGKey(0)
    kx, kp = jax.random.split(key)
    x = jax.random.normal(kx, (batch, n_in), jnp.float32)
    w1, b1, w2, b2 = init_params(kp, n_in, n_units, n_out)

    fwd = jax.jit(functools.partial(neural_network_forward,
                                    block_batch=512, use_bf16=False))
    out = jax.block_until_ready(fwd(x, w1, b1, w2, b2))

    # Sanity check against a pure-JAX reference of the same forward pass.
    ref = jnp.maximum(x @ w1 + b1.reshape(1, -1), 0.0) @ w2 + b2.reshape(1, -1)
    assert out.shape == (batch, n_out)
    assert jnp.allclose(out, ref, atol=1e-5, rtol=1e-5)

    # TODO(synk): if bit-exactness is not required, call with use_bf16=True to
    # halve streamed HBM bytes (loosen the tolerance to ~1e-2 relative).

    print("KERNEL_OK")
</pallas_src>

<mosaic_0001>
module attributes {stable_mosaic.version = 11 : i64} {
  func.func @mlp_kernel(%arg0: i32, %arg1: memref<512x4xf32, #tpu.memory_space<vmem>>, %arg2: memref<128x128xf32, #tpu.memory_space<vmem>>, %arg3: memref<1x128xf32, #tpu.memory_space<vmem>>, %arg4: memref<128x128xf32, #tpu.memory_space<vmem>>, %arg5: memref<1x128xf32, #tpu.memory_space<vmem>>, %arg6: memref<512x3xf32, #tpu.memory_space<vmem>>, %arg7: memref<512x128xf32, #tpu.memory_space<vmem>>) attributes {dimension_semantics = [#tpu.dimension_semantics<parallel>], iteration_bounds = array<i64: 1>, scalar_prefetch = 0 : i64, scratch_operands = 1 : i64, tpu.core_type = #tpu.core_type<tc>, window_params = [{transform_indices = @transform_0, window_bounds = array<i64: 512, 4>}, {pipeline_mode = #tpu.pipeline_mode<synchronous>, transform_indices = @transform_1, window_bounds = array<i64: 128, 128>}, {pipeline_mode = #tpu.pipeline_mode<synchronous>, transform_indices = @transform_2, window_bounds = array<i64: 1, 128>}, {pipeline_mode = #tpu.pipeline_mode<synchronous>, transform_indices = @transform_3, window_bounds = array<i64: 128, 128>}, {pipeline_mode = #tpu.pipeline_mode<synchronous>, transform_indices = @transform_4, window_bounds = array<i64: 1, 128>}, {transform_indices = @transform_5, window_bounds = array<i64: 512, 3>}]} {
    %cst = arith.constant 0.000000e+00 : f32
    %0 = vector.broadcast %cst : f32 to vector<512x128xf32>
    %c0 = arith.constant 0 : index
    %c0_0 = arith.constant 0 : index
    %1 = vector.load %arg7[%c0, %c0_0] : memref<512x128xf32, #tpu.memory_space<vmem>>, vector<512x128xf32>
    tpu.vector_store %arg7[%c0, %c0_0], %0 {strides = array<i32>} : memref<512x128xf32, #tpu.memory_space<vmem>>, vector<512x128xf32>,
    %c0_1 = arith.constant 0 : index
    %c0_2 = arith.constant 0 : index
    %2 = vector.load %arg1[%c0_1, %c0_2] : memref<512x4xf32, #tpu.memory_space<vmem>>, vector<512x4xf32>
    %c0_3 = arith.constant 0 : index
    %c0_4 = arith.constant 0 : index
    %3 = vector.load %arg7[%c0_3, %c0_4] : memref<512x128xf32, #tpu.memory_space<vmem>>, vector<512x4xf32>
    tpu.vector_store %arg7[%c0_3, %c0_4], %2 {strides = array<i32>} : memref<512x128xf32, #tpu.memory_space<vmem>>, vector<512x4xf32>,
    %c0_5 = arith.constant 0 : index
    %c0_6 = arith.constant 0 : index
    %4 = vector.load %arg7[%c0_5, %c0_6] : memref<512x128xf32, #tpu.memory_space<vmem>>, vector<512x128xf32>
    %c0_7 = arith.constant 0 : index
    %c0_8 = arith.constant 0 : index
    %5 = vector.load %arg2[%c0_7, %c0_8] : memref<128x128xf32, #tpu.memory_space<vmem>>, vector<128x128xf32>
    %cst_9 = arith.constant dense<0.000000e+00> : vector<512x128xf32>
    %6 = tpu.matmul %4, %5, %cst_9 {dimension_numbers = #tpu.dot_dimension_numbers<[1], [0], [0], [1], [0, 0, 1, 1], [], []>} : vector<512x128xf32>, vector<128x128xf32>, vector<512x128xf32> -> vector<512x128xf32>
    %c0_10 = arith.constant 0 : index
    %c0_11 = arith.constant 0 : index
    %7 = vector.load %arg3[%c0_10, %c0_11] : memref<1x128xf32, #tpu.memory_space<vmem>>, vector<1x128xf32>
    %8 = vector.broadcast %7 : vector<1x128xf32> to vector<512x128xf32>
    %9 = arith.addf %6, %8 : vector<512x128xf32>
    %cst_12 = arith.constant 0.000000e+00 : f32
    %10 = vector.broadcast %cst_12 : f32 to vector<512x128xf32>
    %11 = arith.maximumf %9, %10 : vector<512x128xf32>
    %c0_13 = arith.constant 0 : index
    %c0_14 = arith.constant 0 : index
    %12 = vector.load %arg4[%c0_13, %c0_14] : memref<128x128xf32, #tpu.memory_space<vmem>>, vector<128x128xf32>
    %cst_15 = arith.constant dense<0.000000e+00> : vector<512x128xf32>
    %13 = tpu.matmul %11, %12, %cst_15 {dimension_numbers = #tpu.dot_dimension_numbers<[1], [0], [0], [1], [0, 0, 1, 1], [], []>} : vector<512x128xf32>, vector<128x128xf32>, vector<512x128xf32> -> vector<512x128xf32>
    %c0_16 = arith.constant 0 : index
    %c0_17 = arith.constant 0 : index
    %14 = vector.load %arg5[%c0_16, %c0_17] : memref<1x128xf32, #tpu.memory_space<vmem>>, vector<1x128xf32>
    %15 = vector.broadcast %14 : vector<1x128xf32> to vector<512x128xf32>
    %16 = arith.addf %13, %15 : vector<512x128xf32>
    %17 = vector.extract_strided_slice %16 {offsets = [0, 0], sizes = [512, 3], strides = [1, 1]} : vector<512x128xf32> to vector<512x3xf32>
    %c0_18 = arith.constant 0 : index
    %c0_19 = arith.constant 0 : index
    %18 = vector.load %arg6[%c0_18, %c0_19] : memref<512x3xf32, #tpu.memory_space<vmem>>, vector<512x3xf32>
    tpu.vector_store %arg6[%c0_18, %c0_19], %17 {strides = array<i32>} : memref<512x3xf32, #tpu.memory_space<vmem>>, vector<512x3xf32>,
    return
  }
  func.func @transform_0(%arg0: i32) -> (i32, i32) {
    %c0_i32 = arith.constant 0 : i32
    %c0_i32_0 = arith.constant 0 : i32
    return %arg0, %c0_i32 : i32, i32
  }
  func.func @transform_1(%arg0: i32) -> (i32, i32) {
    %c0_i32 = arith.constant 0 : i32
    %c0_i32_0 = arith.constant 0 : i32
    %c0_i32_1 = arith.constant 0 : i32
    return %c0_i32, %c0_i32_0 : i32, i32
  }
  func.func @transform_2(%arg0: i32) -> (i32, i32) {
    %c0_i32 = arith.constant 0 : i32
    %c0_i32_0 = arith.constant 0 : i32
    %c0_i32_1 = arith.constant 0 : i32
    return %c0_i32, %c0_i32_0 : i32, i32
  }
  func.func @transform_3(%arg0: i32) -> (i32, i32) {
    %c0_i32 = arith.constant 0 : i32
    %c0_i32_0 = arith.constant 0 : i32
    %c0_i32_1 = arith.constant 0 : i32
    return %c0_i32, %c0_i32_0 : i32, i32
  }
  func.func @transform_4(%arg0: i32) -> (i32, i32) {
    %c0_i32 = arith.constant 0 : i32
    %c0_i32_0 = arith.constant 0 : i32
    %c0_i32_1 = arith.constant 0 : i32
    return %c0_i32, %c0_i32_0 : i32, i32
  }
  func.func @transform_5(%arg0: i32) -> (i32, i32) {
    %c0_i32 = arith.constant 0 : i32
    %c0_i32_0 = arith.constant 0 : i32
    return %arg0, %c0_i32 : i32, i32
  }
}

</mosaic_0001>

<llo_original>
// kernel: neural_network_forward.1
$region0: #{neural_network_forward.1}
  #allocation0 [shape = 'u32[]', space=smem, size = 0x4, offset = 0x4, fixed_abs, tag = 'smem constant byte address 0x4 - core index']
  #allocation1 [shape = 'u32[144,128]{1,0:T(1,128)}', space=vmem, size = 0x12000, scoped, tag = 'internal scratch']
  #allocation2 [shape = 'f32[512,128]{1,0:T(8,128)}', space=vmem, size = 0x40000, scoped, tag = 'scratch operand']
  %s0 = inlined_call_operand.vmem [shape: f32[512,4], index: 0, kind: input, shape index: {}]
  %s1 = inlined_call_operand.vmem [shape: f32[128,128], index: 1, kind: input, shape index: {}]
  %s2 = inlined_call_operand.vmem [shape: f32[1,128], index: 2, kind: input, shape index: {}]
  %s3 = inlined_call_operand.vmem [shape: f32[128,128], index: 3, kind: input, shape index: {}]
  %s4 = inlined_call_operand.vmem [shape: f32[1,128], index: 4, kind: input, shape index: {}]
  %s5 = inlined_call_operand.vmem [shape: f32[512,3], index: 5, kind: output, shape index: {}]
  %s6 = sld [smem:[#allocation0]]
  $region30: #{neural_network_forward.1} parent=0
    _
  %s8 = ssub.s32 1, %s6
  %s9 = scalar_select 0, %s8, %s6
  // Predicated region
  $region2: #{neural_network_forward.1} parent=0 // pred_check
    _
  $region3: #{neural_network_forward.1} parent=0 // pred_check_branch
    %11 = sbr.rel (0) target = $region5
  $region4: #{neural_network_forward.1} parent=0 // pred_region
    _
  $region5: #{neural_network_forward.1} parent=0 // pred_fallthru
    _
  // Predicated region
  $region6: #{neural_network_forward.1} parent=0 // pred_check
    _
  $region7: #{neural_network_forward.1} parent=0 // pred_check_branch
    %13 = sbr.rel (0) target = $region9
  $region8: #{neural_network_forward.1} parent=0 // pred_region
    _
  $region9: #{neural_network_forward.1} parent=0 // pred_fallthru
    _
  // Predicated region
  $region10: #{neural_network_forward.1} parent=0 // pred_check
    _
  $region11: #{neural_network_forward.1} parent=0 // pred_check_branch
    %15 = sbr.rel (0) target = $region13
  $region12: #{neural_network_forward.1} parent=0 // pred_region
    _
  $region13: #{neural_network_forward.1} parent=0 // pred_fallthru
    _
  // Predicated region
  $region14: #{neural_network_forward.1} parent=0 // pred_check
    _
  $region15: #{neural_network_forward.1} parent=0 // pred_check_branch
    %17 = sbr.rel (0) target = $region17
  $region16: #{neural_network_forward.1} parent=0 // pred_region
    _
  $region17: #{neural_network_forward.1} parent=0 // pred_fallthru
    _
  // Predicated region
  $region18: #{neural_network_forward.1} parent=0 // pred_check
    _
  $region19: #{neural_network_forward.1} parent=0 // pred_check_branch
    %19 = sbr.rel (0) target = $region21
  $region20: #{neural_network_forward.1} parent=0 // pred_region
    _
  $region21: #{neural_network_forward.1} parent=0 // pred_fallthru
    _
  %20 = vst [vmem:[#allocation2] sm:$0xff] 0.0
  %21 = vst [vmem:[#allocation2 + $0x8] sm:$0xff] 0.0
  %22 = vst [vmem:[#allocation2 + $0x10] sm:$0xff] 0.0
  %23 = vst [vmem:[#allocation2 + $0x18] sm:$0xff] 0.0
  %24 = vst [vmem:[#allocation2 + $0x20] sm:$0xff] 0.0
  %25 = vst [vmem:[#allocation2 + $0x28] sm:$0xff] 0.0
  %26 = vst [vmem:[#allocation2 + $0x30] sm:$0xff] 0.0
  %27 = vst [vmem:[#allocation2 + $0x38] sm:$0xff] 0.0
  %28 = vst [vmem:[#allocation2 + $0x40] sm:$0xff] 0.0
  %29 = vst [vmem:[#allocation2 + $0x48] sm:$0xff] 0.0
  %30 = vst [vmem:[#allocation2 + $0x50] sm:$0xff] 0.0
  %31 = vst [vmem:[#allocation2 + $0x58] sm:$0xff] 0.0
  %32 = vst [vmem:[#allocation2 + $0x60] sm:$0xff] 0.0
  %33 = vst [vmem:[#allocation2 + $0x68] sm:$0xff] 0.0
  %34 = vst [vmem:[#allocation2 + $0x70] sm:$0xff] 0.0
  %35 = vst [vmem:[#allocation2 + $0x78] sm:$0xff] 0.0
  %36 = vst [vmem:[#allocation2 + $0x80] sm:$0xff] 0.0
  %37 = vst [vmem:[#allocation2 + $0x88] sm:$0xff] 0.0
  %38 = vst [vmem:[#allocation2 + $0x90] sm:$0xff] 0.0
  %39 = vst [vmem:[#allocation2 + $0x98] sm:$0xff] 0.0
  %40 = vst [vmem:[#allocation2 + $0xa0] sm:$0xff] 0.0
  %41 = vst [vmem:[#allocation2 + $0xa8] sm:$0xff] 0.0
  %42 = vst [vmem:[#allocation2 + $0xb0] sm:$0xff] 0.0
  %43 = vst [vmem:[#allocation2 + $0xb8] sm:$0xff] 0.0
  %44 = vst [vmem:[#allocation2 + $0xc0] sm:$0xff] 0.0
  %45 = vst [vmem:[#allocation2 + $0xc8] sm:$0xff] 0.0
  %46 = vst [vmem:[#allocation2 + $0xd0] sm:$0xff] 0.0
  %47 = vst [vmem:[#allocation2 + $0xd8] sm:$0xff] 0.0
  %48 = vst [vmem:[#allocation2 + $0xe0] sm:$0xff] 0.0
  %49 = vst [vmem:[#allocation2 + $0xe8] sm:$0xff] 0.0
  %50 = vst [vmem:[#allocation2 + $0xf0] sm:$0xff] 0.0
  %51 = vst [vmem:[#allocation2 + $0xf8] sm:$0xff] 0.0
  %52 = vst [vmem:[#allocation2 + $0x100] sm:$0xff] 0.0
  %53 = vst [vmem:[#allocation2 + $0x108] sm:$0xff] 0.0
  %54 = vst [vmem:[#allocation2 + $0x110] sm:$0xff] 0.0
  %55 = vst [vmem:[#allocation2 + $0x118] sm:$0xff] 0.0
  %56 = vst [vmem:[#allocation2 + $0x120] sm:$0xff] 0.0
  %57 = vst [vmem:[#allocation2 + $0x128] sm:$0xff] 0.0
  %58 = vst [vmem:[#allocation2 + $0x130] sm:$0xff] 0.0
  %59 = vst [vmem:[#allocation2 + $0x138] sm:$0xff] 0.0
  %60 = vst [vmem:[#allocation2 + $0x140] sm:$0xff] 0.0
  %61 = vst [vmem:[#allocation2 + $0x148] sm:$0xff] 0.0
  %62 = vst [vmem:[#allocation2 + $0x150] sm:$0xff] 0.0
  %63 = vst [vmem:[#allocation2 + $0x158] sm:$0xff] 0.0
  %64 = vst [vmem:[#allocation2 + $0x160] sm:$0xff] 0.0
  %65 = vst [vmem:[#allocation2 + $0x168] sm:$0xff] 0.0
  %66 = vst [vmem:[#allocation2 + $0x170] sm:$0xff] 0.0
  %67 = vst [vmem:[#allocation2 + $0x178] sm:$0xff] 0.0
  %68 = vst [vmem:[#allocation2 + $0x180] sm:$0xff] 0.0
  %69 = vst [vmem:[#allocation2 + $0x188] sm:$0xff] 0.0
  %70 = vst [vmem:[#allocation2 + $0x190] sm:$0xff] 0.0
  %71 = vst [vmem:[#allocation2 + $0x198] sm:$0xff] 0.0
  %72 = vst [vmem:[#allocation2 + $0x1a0] sm:$0xff] 0.0
  %73 = vst [vmem:[#allocation2 + $0x1a8] sm:$0xff] 0.0
  %74 = vst [vmem:[#allocation2 + $0x1b0] sm:$0xff] 0.0
  %75 = vst [vmem:[#allocation2 + $0x1b8] sm:$0xff] 0.0
  %76 = vst [vmem:[#allocation2 + $0x1c0] sm:$0xff] 0.0
  %77 = vst [vmem:[#allocation2 + $0x1c8] sm:$0xff] 0.0
  %78 = vst [vmem:[#allocation2 + $0x1d0] sm:$0xff] 0.0
  %79 = vst [vmem:[#allocation2 + $0x1d8] sm:$0xff] 0.0
  %80 = vst [vmem:[#allocation2 + $0x1e0] sm:$0xff] 0.0
  %81 = vst [vmem:[#allocation2 + $0x1e8] sm:$0xff] 0.0
  %82 = vst [vmem:[#allocation2 + $0x1f0] sm:$0xff] 0.0
  %83 = vst [vmem:[#allocation2 + $0x1f8] sm:$0xff] 0.0
  %v84 = vld [vmem:[%s0] sm:$0xff]
  %v85 = vld [vmem:[%s0 + $0x8] sm:$0xff]
  %v86 = vld [vmem:[%s0 + $0x10] sm:$0xff]
  %v87 = vld [vmem:[%s0 + $0x18] sm:$0xff]
  %v88 = vld [vmem:[%s0 + $0x20] sm:$0xff]
  %v89 = vld [vmem:[%s0 + $0x28] sm:$0xff]
  %v90 = vld [vmem:[%s0 + $0x30] sm:$0xff]
  %v91 = vld [vmem:[%s0 + $0x38] sm:$0xff]
  %v92 = vld [vmem:[%s0 + $0x40] sm:$0xff]
  %v93 = vld [vmem:[%s0 + $0x48] sm:$0xff]
  %v94 = vld [vmem:[%s0 + $0x50] sm:$0xff]
  %v95 = vld [vmem:[%s0 + $0x58] sm:$0xff]
  %v96 = vld [vmem:[%s0 + $0x60] sm:$0xff]
  %v97 = vld [vmem:[%s0 + $0x68] sm:$0xff]
  %v98 = vld [vmem:[%s0 + $0x70] sm:$0xff]
  %v99 = vld [vmem:[%s0 + $0x78] sm:$0xff]
  %v100 = vld [vmem:[%s0 + $0x80] sm:$0xff]
  %v101 = vld [vmem:[%s0 + $0x88] sm:$0xff]
  %v102 = vld [vmem:[%s0 + $0x90] sm:$0xff]
  %v103 = vld [vmem:[%s0 + $0x98] sm:$0xff]
  %v104 = vld [vmem:[%s0 + $0xa0] sm:$0xff]
  %v105 = vld [vmem:[%s0 + $0xa8] sm:$0xff]
  %v106 = vld [vmem:[%s0 + $0xb0] sm:$0xff]
  %v107 = vld [vmem:[%s0 + $0xb8] sm:$0xff]
  %v108 = vld [vmem:[%s0 + $0xc0] sm:$0xff]
  %v109 = vld [vmem:[%s0 + $0xc8] sm:$0xff]
  %v110 = vld [vmem:[%s0 + $0xd0] sm:$0xff]
  %v111 = vld [vmem:[%s0 + $0xd8] sm:$0xff]
  %v112 = vld [vmem:[%s0 + $0xe0] sm:$0xff]
  %v113 = vld [vmem:[%s0 + $0xe8] sm:$0xff]
  %v114 = vld [vmem:[%s0 + $0xf0] sm:$0xff]
  %v115 = vld [vmem:[%s0 + $0xf8] sm:$0xff]
  %v116 = vld [vmem:[%s0 + $0x100] sm:$0xff]
  %v117 = vld [vmem:[%s0 + $0x108] sm:$0xff]
  %v118 = vld [vmem:[%s0 + $0x110] sm:$0xff]
  %v119 = vld [vmem:[%s0 + $0x118] sm:$0xff]
  %v120 = vld [vmem:[%s0 + $0x120] sm:$0xff]
  %v121 = vld [vmem:[%s0 + $0x128] sm:$0xff]
  %v122 = vld [vmem:[%s0 + $0x130] sm:$0xff]
  %v123 = vld [vmem:[%s0 + $0x138] sm:$0xff]
  %v124 = vld [vmem:[%s0 + $0x140] sm:$0xff]
  %v125 = vld [vmem:[%s0 + $0x148] sm:$0xff]
  %v126 = vld [vmem:[%s0 + $0x150] sm:$0xff]
  %v127 = vld [vmem:[%s0 + $0x158] sm:$0xff]
  %v128 = vld [vmem:[%s0 + $0x160] sm:$0xff]
  %v129 = vld [vmem:[%s0 + $0x168] sm:$0xff]
  %v130 = vld [vmem:[%s0 + $0x170] sm:$0xff]
  %v131 = vld [vmem:[%s0 + $0x178] sm:$0xff]
  %v132 = vld [vmem:[%s0 + $0x180] sm:$0xff]
  %v133 = vld [vmem:[%s0 + $0x188] sm:$0xff]
  %v134 = vld [vmem:[%s0 + $0x190] sm:$0xff]
  %v135 = vld [vmem:[%s0 + $0x198] sm:$0xff]
  %v136 = vld [vmem:[%s0 + $0x1a0] sm:$0xff]
  %v137 = vld [vmem:[%s0 + $0x1a8] sm:$0xff]
  %v138 = vld [vmem:[%s0 + $0x1b0] sm:$0xff]
  %v139 = vld [vmem:[%s0 + $0x1b8] sm:$0xff]
  %v140 = vld [vmem:[%s0 + $0x1c0] sm:$0xff]
  %v141 = vld [vmem:[%s0 + $0x1c8] sm:$0xff]
  %v142 = vld [vmem:[%s0 + $0x1d0] sm:$0xff]
  %v143 = vld [vmem:[%s0 + $0x1d8] sm:$0xff]
  %v144 = vld [vmem:[%s0 + $0x1e0] sm:$0xff]
  %v145 = vld [vmem:[%s0 + $0x1e8] sm:$0xff]
  %v146 = vld [vmem:[%s0 + $0x1f0] sm:$0xff]
  %v147 = vld [vmem:[%s0 + $0x1f8] sm:$0xff]
  %vm148 = vcmask 31744
  %149 = vst.msk [vmem:[#allocation2] sm:$0xff] %vm148, %v84
  %150 = vst.msk [vmem:[#allocation2 + $0x8] sm:$0xff] %vm148, %v85
  %151 = vst.msk [vmem:[#allocation2 + $0x10] sm:$0xff] %vm148, %v86
  %152 = vst.msk [vmem:[#allocation2 + $0x18] sm:$0xff] %vm148, %v87
  %153 = vst.msk [vmem:[#allocation2 + $0x20] sm:$0xff] %vm148, %v88
  %154 = vst.msk [vmem:[#allocation2 + $0x28] sm:$0xff] %vm148, %v89
  %155 = vst.msk [vmem:[#allocation2 + $0x30] sm:$0xff] %vm148, %v90
  %156 = vst.msk [vmem:[#allocation2 + $0x38] sm:$0xff] %vm148, %v91
  %157 = vst.msk [vmem:[#allocation2 + $0x40] sm:$0xff] %vm148, %v92
  %158 = vst.msk [vmem:[#allocation2 + $0x48] sm:$0xff] %vm148, %v93
  %159 = vst.msk [vmem:[#allocation2 + $0x50] sm:$0xff] %vm148, %v94
  %160 = vst.msk [vmem:[#allocation2 + $0x58] sm:$0xff] %vm148, %v95
  %161 = vst.msk [vmem:[#allocation2 + $0x60] sm:$0xff] %vm148, %v96
  %162 = vst.msk [vmem:[#allocation2 + $0x68] sm:$0xff] %vm148, %v97
  %163 = vst.msk [vmem:[#allocation2 + $0x70] sm:$0xff] %vm148, %v98
  %164 = vst.msk [vmem:[#allocation2 + $0x78] sm:$0xff] %vm148, %v99
  %165 = vst.msk [vmem:[#allocation2 + $0x80] sm:$0xff] %vm148, %v100
  %166 = vst.msk [vmem:[#allocation2 + $0x88] sm:$0xff] %vm148, %v101
  %167 = vst.msk [vmem:[#allocation2 + $0x90] sm:$0xff] %vm148, %v102
  %168 = vst.msk [vmem:[#allocation2 + $0x98] sm:$0xff] %vm148, %v103
  %169 = vst.msk [vmem:[#allocation2 + $0xa0] sm:$0xff] %vm148, %v104
  %170 = vst.msk [vmem:[#allocation2 + $0xa8] sm:$0xff] %vm148, %v105
  %171 = vst.msk [vmem:[#allocation2 + $0xb0] sm:$0xff] %vm148, %v106
  %172 = vst.msk [vmem:[#allocation2 + $0xb8] sm:$0xff] %vm148, %v107
  %173 = vst.msk [vmem:[#allocation2 + $0xc0] sm:$0xff] %vm148, %v108
  %174 = vst.msk [vmem:[#allocation2 + $0xc8] sm:$0xff] %vm148, %v109
  %175 = vst.msk [vmem:[#allocation2 + $0xd0] sm:$0xff] %vm148, %v110
  %176 = vst.msk [vmem:[#allocation2 + $0xd8] sm:$0xff] %vm148, %v111
  %177 = vst.msk [vmem:[#allocation2 + $0xe0] sm:$0xff] %vm148, %v112
  %178 = vst.msk [vmem:[#allocation2 + $0xe8] sm:$0xff] %vm148, %v113
  %179 = vst.msk [vmem:[#allocation2 + $0xf0] sm:$0xff] %vm148, %v114
  %180 = vst.msk [vmem:[#allocation2 + $0xf8] sm:$0xff] %vm148, %v115
  %181 = vst.msk [vmem:[#allocation2 + $0x100] sm:$0xff] %vm148, %v116
  %182 = vst.msk [vmem:[#allocation2 + $0x108] sm:$0xff] %vm148, %v117
  %183 = vst.msk [vmem:[#allocation2 + $0x110] sm:$0xff] %vm148, %v118
  %184 = vst.msk [vmem:[#allocation2 + $0x118] sm:$0xff] %vm148, %v119
  %185 = vst.msk [vmem:[#allocation2 + $0x120] sm:$0xff] %vm148, %v120
  %186 = vst.msk [vmem:[#allocation2 + $0x128] sm:$0xff] %vm148, %v121
  %187 = vst.msk [vmem:[#allocation2 + $0x130] sm:$0xff] %vm148, %v122
  %188 = vst.msk [vmem:[#allocation2 + $0x138] sm:$0xff] %vm148, %v123
  %189 = vst.msk [vmem:[#allocation2 + $0x140] sm:$0xff] %vm148, %v124
  %190 = vst.msk [vmem:[#allocation2 + $0x148] sm:$0xff] %vm148, %v125
  %191 = vst.msk [vmem:[#allocation2 + $0x150] sm:$0xff] %vm148, %v126
  %192 = vst.msk [vmem:[#allocation2 + $0x158] sm:$0xff] %vm148, %v127
  %193 = vst.msk [vmem:[#allocation2 + $0x160] sm:$0xff] %vm148, %v128
  %194 = vst.msk [vmem:[#allocation2 + $0x168] sm:$0xff] %vm148, %v129
  %195 = vst.msk [vmem:[#allocation2 + $0x170] sm:$0xff] %vm148, %v130
  %196 = vst.msk [vmem:[#allocation2 + $0x178] sm:$0xff] %vm148, %v131
  %197 = vst.msk [vmem:[#allocation2 + $0x180] sm:$0xff] %vm148, %v132
  %198 = vst.msk [vmem:[#allocation2 + $0x188] sm:$0xff] %vm148, %v133
  %199 = vst.msk [vmem:[#allocation2 + $0x190] sm:$0xff] %vm148, %v134
  %200 = vst.msk [vmem:[#allocation2 + $0x198] sm:$0xff] %vm148, %v135
  %201 = vst.msk [vmem:[#allocation2 + $0x1a0] sm:$0xff] %vm148, %v136
  %202 = vst.msk [vmem:[#allocation2 + $0x1a8] sm:$0xff] %vm148, %v137
  %203 = vst.msk [vmem:[#allocation2 + $0x1b0] sm:$0xff] %vm148, %v138
  %204 = vst.msk [vmem:[#allocation2 + $0x1b8] sm:$0xff] %vm148, %v139
  %205 = vst.msk [vmem:[#allocation2 + $0x1c0] sm:$0xff] %vm148, %v140
  %206 = vst.msk [vmem:[#allocation2 + $0x1c8] sm:$0xff] %vm148, %v141
  %207 = vst.msk [vmem:[#allocation2 + $0x1d0] sm:$0xff] %vm148, %v142
  %208 = vst.msk [vmem:[#allocation2 + $0x1d8] sm:$0xff] %vm148, %v143
  %209 = vst.msk [vmem:[#allocation2 + $0x1e0] sm:$0xff] %vm148, %v144
  %210 = vst.msk [vmem:[#allocation2 + $0x1e8] sm:$0xff] %vm148, %v145
  %211 = vst.msk [vmem:[#allocation2 + $0x1f0] sm:$0xff] %vm148, %v146
  %212 = vst.msk [vmem:[#allocation2 + $0x1f8] sm:$0xff] %vm148, %v147
  %v213 = vld [vmem:[#allocation2] sm:$0xff]
  %v214 = vld [vmem:[#allocation2 + $0x8] sm:$0xff]
  %v215 = vld [vmem:[#allocation2 + $0x10] sm:$0xff]
  %v216 = vld [vmem:[#allocation2 + $0x18] sm:$0xff]
  %v217 = vld [vmem:[#allocation2 + $0x20] sm:$0xff]
  %v218 = vld [vmem:[#allocation2 + $0x28] sm:$0xff]
  %v219 = vld [vmem:[#allocation2 + $0x30] sm:$0xff]
  %v220 = vld [vmem:[#allocation2 + $0x38] sm:$0xff]
  %v221 = vld [vmem:[#allocation2 + $0x40] sm:$0xff]
  %v222 = vld [vmem:[#allocation2 + $0x48] sm:$0xff]
  %v223 = vld [vmem:[#allocation2 + $0x50] sm:$0xff]
  %v224 = vld [vmem:[#allocation2 + $0x58] sm:$0xff]
  %v225 = vld [vmem:[#allocation2 + $0x60] sm:$0xff]
  %v226 = vld [vmem:[#allocation2 + $0x68] sm:$0xff]
  %v227 = vld [vmem:[#allocation2 + $0x70] sm:$0xff]
  %v228 = vld [vmem:[#allocation2 + $0x78] sm:$0xff]
  %v229 = vld [vmem:[#allocation2 + $0x80] sm:$0xff]
  %v230 = vld [vmem:[#allocation2 + $0x88] sm:$0xff]
  %v231 = vld [vmem:[#allocation2 + $0x90] sm:$0xff]
  %v232 = vld [vmem:[#allocation2 + $0x98] sm:$0xff]
  %v233 = vld [vmem:[#allocation2 + $0xa0] sm:$0xff]
  %v234 = vld [vmem:[#allocation2 + $0xa8] sm:$0xff]
  %v235 = vld [vmem:[#allocation2 + $0xb0] sm:$0xff]
  %v236 = vld [vmem:[#allocation2 + $0xb8] sm:$0xff]
  %v237 = vld [vmem:[#allocation2 + $0xc0] sm:$0xff]
  %v238 = vld [vmem:[#allocation2 + $0xc8] sm:$0xff]
  %v239 = vld [vmem:[#allocation2 + $0xd0] sm:$0xff]
  %v240 = vld [vmem:[#allocation2 + $0xd8] sm:$0xff]
  %v241 = vld [vmem:[#allocation2 + $0xe0] sm:$0xff]
  %v242 = vld [vmem:[#allocation2 + $0xe8] sm:$0xff]
  %v243 = vld [vmem:[#allocation2 + $0xf0] sm:$0xff]
  %v244 = vld [vmem:[#allocation2 + $0xf8] sm:$0xff]
  %v245 = vld [vmem:[#allocation2 + $0x100] sm:$0xff]
  %v246 = vld [vmem:[#allocation2 + $0x108] sm:$0xff]
  %v247 = vld [vmem:[#allocation2 + $0x110] sm:$0xff]
  %v248 = vld [vmem:[#allocation2 + $0x118] sm:$0xff]
  %v249 = vld [vmem:[#allocation2 + $0x120] sm:$0xff]
  %v250 = vld [vmem:[#allocation2 + $0x128] sm:$0xff]
  %v251 = vld [vmem:[#allocation2 + $0x130] sm:$0xff]
  %v252 = vld [vmem:[#allocation2 + $0x138] sm:$0xff]
  %v253 = vld [vmem:[#allocation2 + $0x140] sm:$0xff]
  %v254 = vld [vmem:[#allocation2 + $0x148] sm:$0xff]
  %v255 = vld [vmem:[#allocation2 + $0x150] sm:$0xff]
  %v256 = vld [vmem:[#allocation2 + $0x158] sm:$0xff]
  %v257 = vld [vmem:[#allocation2 + $0x160] sm:$0xff]
  %v258 = vld [vmem:[#allocation2 + $0x168] sm:$0xff]
  %v259 = vld [vmem:[#allocation2 + $0x170] sm:$0xff]
  %v260 = vld [vmem:[#allocation2 + $0x178] sm:$0xff]
  %v261 = vld [vmem:[#allocation2 + $0x180] sm:$0xff]
  %v262 = vld [vmem:[#allocation2 + $0x188] sm:$0xff]
  %v263 = vld [vmem:[#allocation2 + $0x190] sm:$0xff]
  %v264 = vld [vmem:[#allocation2 + $0x198] sm:$0xff]
  %v265 = vld [vmem:[#allocation2 + $0x1a0] sm:$0xff]
  %v266 = vld [vmem:[#allocation2 + $0x1a8] sm:$0xff]
  %v267 = vld [vmem:[#allocation2 + $0x1b0] sm:$0xff]
  %v268 = vld [vmem:[#allocation2 + $0x1b8] sm:$0xff]
  %v269 = vld [vmem:[#allocation2 + $0x1c0] sm:$0xff]
  %v270 = vld [vmem:[#allocation2 + $0x1c8] sm:$0xff]
  %v271 = vld [vmem:[#allocation2 + $0x1d0] sm:$0xff]
  %v272 = vld [vmem:[#allocation2 + $0x1d8] sm:$0xff]
  %v273 = vld [vmem:[#allocation2 + $0x1e0] sm:$0xff]
  %v274 = vld [vmem:[#allocation2 + $0x1e8] sm:$0xff]
  %v275 = vld [vmem:[#allocation2 + $0x1f0] sm:$0xff]
  %v276 = vld [vmem:[#allocation2 + $0x1f8] sm:$0xff]
  %v277 = vld [vmem:[%s1] sm:$0xff]
  %v278 = vld [vmem:[%s1 + $0x8] sm:$0xff]
  %v279 = vld [vmem:[%s1 + $0x10] sm:$0xff]
  %v280 = vld [vmem:[%s1 + $0x18] sm:$0xff]
  %v281 = vld [vmem:[%s1 + $0x20] sm:$0xff]
  %v282 = vld [vmem:[%s1 + $0x28] sm:$0xff]
  %v283 = vld [vmem:[%s1 + $0x30] sm:$0xff]
  %v284 = vld [vmem:[%s1 + $0x38] sm:$0xff]
  %v285 = vld [vmem:[%s1 + $0x40] sm:$0xff]
  %v286 = vld [vmem:[%s1 + $0x48] sm:$0xff]
  %v287 = vld [vmem:[%s1 + $0x50] sm:$0xff]
  %v288 = vld [vmem:[%s1 + $0x58] sm:$0xff]
  %v289 = vld [vmem:[%s1 + $0x60] sm:$0xff]
  %v290 = vld [vmem:[%s1 + $0x68] sm:$0xff]
  %v291 = vld [vmem:[%s1 + $0x70] sm:$0xff]
  %v292 = vld [vmem:[%s1 + $0x78] sm:$0xff]
  %v293 = vld [vmem:[%s2] sm:$0x1]
  %v295 = vlaneseq
  %v296 = vshrl.u32 %v295, 7
  %v297 = vsub.s32 0, %v296
  %v298 = vrot.slane %v293, %v297
  %300 = vmatprep.subr.mxu0 0.0
  %301 = vmatpush1.msra.mxu0 %v292
  %302 = vmatprep.subr.mxu0 0.0
  %303 = vmatpush1.msra.mxu0 %v291
  %304 = vmatprep.subr.mxu0 0.0
  %305 = vmatpush1.msra.mxu0 %v290
  %306 = vmatprep.subr.mxu0 0.0
  %307 = vmatpush1.msra.mxu0 %v289
  %308 = vmatprep.subr.mxu0 0.0
  %309 = vmatpush1.msra.mxu0 %v288
  %310 = vmatprep.subr.mxu0 0.0
  %311 = vmatpush1.msra.mxu0 %v287
  %312 = vmatprep.subr.mxu0 0.0
  %313 = vmatpush1.msra.mxu0 %v286
  %314 = vmatprep.subr.mxu0 0.0
  %315 = vmatpush1.msra.mxu0 %v285
  %316 = vmatprep.subr.mxu0 0.0
  %317 = vmatpush1.msra.mxu0 %v284
  %318 = vmatprep.subr.mxu0 0.0
  %319 = vmatpush1.msra.mxu0 %v283
  %320 = vmatprep.subr.mxu0 0.0
  %321 = vmatpush1.msra.mxu0 %v282
  %322 = vmatprep.subr.mxu0 0.0
  %323 = vmatpush1.msra.mxu0 %v281
  %324 = vmatprep.subr.mxu0 0.0
  %325 = vmatpush1.msra.mxu0 %v280
  %326 = vmatprep.subr.mxu0 0.0
  %327 = vmatpush1.msra.mxu0 %v279
  %328 = vmatprep.subr.mxu0 0.0
  %329 = vmatpush1.msra.mxu0 %v278
  %330 = vmatprep.subr.mxu0 0.0
  %331 = vmatpush1.msra.mxu0 %v277
  %332 = vmatprep.subr.mxu0 0.0
  %333 = vmatpush2.msra.mxu0 0.0
  %334 = vmatprep.subr.mxu0 0.0
  %335 = vmatpush2.msra.mxu0 0.0
  %336 = vmatprep.subr.mxu0 0.0
  %337 = vmatpush2.msra.mxu0 0.0
  %338 = vmatprep.subr.mxu0 0.0
  %339 = vmatpush2.msra.mxu0 0.0
  %340 = vmatprep.subr.mxu0 0.0
  %341 = vmatpush2.msra.mxu0 0.0
  %342 = vmatprep.subr.mxu0 0.0
  %343 = vmatpush2.msra.mxu0 0.0
  %344 = vmatprep.subr.mxu0 0.0
  %345 = vmatpush2.msra.mxu0 0.0
  %346 = vmatprep.subr.mxu0 0.0
  %347 = vmatpush2.msra.mxu0 0.0
  %348 = vmatprep.subr.mxu0 0.0
  %349 = vmatpush2.msra.mxu0 0.0
  %350 = vmatprep.subr.mxu0 0.0
  %351 = vmatpush2.msra.mxu0 0.0
  %352 = vmatprep.subr.mxu0 0.0
  %353 = vmatpush2.msra.mxu0 0.0
  %354 = vmatprep.subr.mxu0 0.0
  %355 = vmatpush2.msra.mxu0 0.0
  %356 = vmatprep.subr.mxu0 0.0
  %357 = vmatpush2.msra.mxu0 0.0
  %358 = vmatprep.subr.mxu0 0.0
  %359 = vmatpush2.msra.mxu0 0.0
  %360 = vmatprep.subr.mxu0 0.0
  %361 = vmatpush2.msra.mxu0 0.0
  %362 = vmatprep.subr.mxu0 0.0
  %363 = vmatpush2.msra.mxu0 0.0
  %364 = vmatprep.mubr.f32.mxu0 0.0
  %365 = vmatmul.mubr.f32.gmra.mxu0 %v213
  %v366 = vpop.f32.mrf.mxu0
  %v367 = vadd.f32 %v298, %v366
  %v368 = vpop.f32.mrf.mxu0
  %369 = vmatprep.mubr.f32.mxu0 0.0
  %370 = vmatmul.mubr.f32.gmra.mxu0 %v214
  %v371 = vpop.f32.mrf.mxu0
  %v372 = vadd.f32 %v298, %v371
  %v373 = vpop.f32.mrf.mxu0
  %374 = vmatprep.mubr.f32.mxu0 0.0
  %375 = vmatmul.mubr.f32.gmra.mxu0 %v215
  %v376 = vpop.f32.mrf.mxu0
  %v377 = vadd.f32 %v298, %v376
  %v378 = vpop.f32.mrf.mxu0
  %379 = vmatprep.mubr.f32.mxu0 0.0
  %380 = vmatmul.mubr.f32.gmra.mxu0 %v216
  %v381 = vpop.f32.mrf.mxu0
  %v382 = vadd.f32 %v298, %v381
  %v383 = vpop.f32.mrf.mxu0
  %384 = vmatprep.mubr.f32.mxu0 0.0
  %385 = vmatmul.mubr.f32.gmra.mxu0 %v217
  %v386 = vpop.f32.mrf.mxu0
  %v387 = vadd.f32 %v298, %v386
  %v388 = vpop.f32.mrf.mxu0
  %389 = vmatprep.mubr.f32.mxu0 0.0
  %390 = vmatmul.mubr.f32.gmra.mxu0 %v218
  %v391 = vpop.f32.mrf.mxu0
  %v392 = vadd.f32 %v298, %v391
  %v393 = vpop.f32.mrf.mxu0
  %394 = vmatprep.mubr.f32.mxu0 0.0
  %395 = vmatmul.mubr.f32.gmra.mxu0 %v219
  %v396 = vpop.f32.mrf.mxu0
  %v397 = vadd.f32 %v298, %v396
  %v398 = vpop.f32.mrf.mxu0
  %399 = vmatprep.mubr.f32.mxu0 0.0
  %400 = vmatmul.mubr.f32.gmra.mxu0 %v220
  %v401 = vpop.f32.mrf.mxu0
  %v402 = vadd.f32 %v298, %v401
  %v403 = vpop.f32.mrf.mxu0
  %404 = vmatprep.mubr.f32.mxu0 0.0
  %405 = vmatmul.mubr.f32.gmra.mxu0 %v221
  %v406 = vpop.f32.mrf.mxu0
  %v407 = vadd.f32 %v298, %v406
  %v408 = vpop.f32.mrf.mxu0
  %409 = vmatprep.mubr.f32.mxu0 0.0
  %410 = vmatmul.mubr.f32.gmra.mxu0 %v222
  %v411 = vpop.f32.mrf.mxu0
  %v412 = vadd.f32 %v298, %v411
  %v413 = vpop.f32.mrf.mxu0
  %414 = vmatprep.mubr.f32.mxu0 0.0
  %415 = vmatmul.mubr.f32.gmra.mxu0 %v223
  %v416 = vpop.f32.mrf.mxu0
  %v417 = vadd.f32 %v298, %v416
  %v418 = vpop.f32.mrf.mxu0
  %419 = vmatprep.mubr.f32.mxu0 0.0
  %420 = vmatmul.mubr.f32.gmra.mxu0 %v224
  %v421 = vpop.f32.mrf.mxu0
  %v422 = vadd.f32 %v298, %v421
  %v423 = vpop.f32.mrf.mxu0
  %424 = vmatprep.mubr.f32.mxu0 0.0
  %425 = vmatmul.mubr.f32.gmra.mxu0 %v225
  %v426 = vpop.f32.mrf.mxu0
  %v427 = vadd.f32 %v298, %v426
  %v428 = vpop.f32.mrf.mxu0
  %429 = vmatprep.mubr.f32.mxu0 0.0
  %430 = vmatmul.mubr.f32.gmra.mxu0 %v226
  %v431 = vpop.f32.mrf.mxu0
  %v432 = vadd.f32 %v298, %v431
  %v433 = vpop.f32.mrf.mxu0
  %434 = vmatprep.mubr.f32.mxu0 0.0
  %435 = vmatmul.mubr.f32.gmra.mxu0 %v227
  %v436 = vpop.f32.mrf.mxu0
  %v437 = vadd.f32 %v298, %v436
  %v438 = vpop.f32.mrf.mxu0
  %439 = vmatprep.mubr.f32.mxu0 0.0
  %440 = vmatmul.mubr.f32.gmra.mxu0 %v228
  %v441 = vpop.f32.mrf.mxu0
  %v442 = vadd.f32 %v298, %v441
  %v443 = vpop.f32.mrf.mxu0
  %444 = vmatprep.mubr.f32.mxu0 0.0
  %445 = vmatmul.mubr.f32.gmra.mxu0 %v229
  %v446 = vpop.f32.mrf.mxu0
  %v447 = vadd.f32 %v298, %v446
  %v448 = vpop.f32.mrf.mxu0
  %449 = vmatprep.mubr.f32.mxu0 0.0
  %450 = vmatmul.mubr.f32.gmra.mxu0 %v230
  %v451 = vpop.f32.mrf.mxu0
  %v452 = vadd.f32 %v298, %v451
  %v453 = vpop.f32.mrf.mxu0
  %454 = vmatprep.mubr.f32.mxu0 0.0
  %455 = vmatmul.mubr.f32.gmra.mxu0 %v231
  %v456 = vpop.f32.mrf.mxu0
  %v457 = vadd.f32 %v298, %v456
  %v458 = vpop.f32.mrf.mxu0
  %459 = vmatprep.mubr.f32.mxu0 0.0
  %460 = vmatmul.mubr.f32.gmra.mxu0 %v232
  %v461 = vpop.f32.mrf.mxu0
  %v462 = vadd.f32 %v298, %v461
  %v463 = vpop.f32.mrf.mxu0
  %464 = vmatprep.mubr.f32.mxu0 0.0
  %465 = vmatmul.mubr.f32.gmra.mxu0 %v233
  %v466 = vpop.f32.mrf.mxu0
  %v467 = vadd.f32 %v298, %v466
  %v468 = vpop.f32.mrf.mxu0
  %469 = vmatprep.mubr.f32.mxu0 0.0
  %470 = vmatmul.mubr.f32.gmra.mxu0 %v234
  %v471 = vpop.f32.mrf.mxu0
  %v472 = vadd.f32 %v298, %v471
  %v473 = vpop.f32.mrf.mxu0
  %474 = vmatprep.mubr.f32.mxu0 0.0
  %475 = vmatmul.mubr.f32.gmra.mxu0 %v235
  %v476 = vpop.f32.mrf.mxu0
  %v477 = vadd.f32 %v298, %v476
  %v478 = vpop.f32.mrf.mxu0
  %479 = vmatprep.mubr.f32.mxu0 0.0
  %480 = vmatmul.mubr.f32.gmra.mxu0 %v236
  %v481 = vpop.f32.mrf.mxu0
  %v482 = vadd.f32 %v298, %v481
  %v483 = vpop.f32.mrf.mxu0
  %484 = vmatprep.mubr.f32.mxu0 0.0
  %485 = vmatmul.mubr.f32.gmra.mxu0 %v237
  %v486 = vpop.f32.mrf.mxu0
  %v487 = vadd.f32 %v298, %v486
  %v488 = vpop.f32.mrf.mxu0
  %489 = vmatprep.mubr.f32.mxu0 0.0
  %490 = vmatmul.mubr.f32.gmra.mxu0 %v238
  %v491 = vpop.f32.mrf.mxu0
  %v492 = vadd.f32 %v298, %v491
  %v493 = vpop.f32.mrf.mxu0
  %494 = vmatprep.mubr.f32.mxu0 0.0
  %495 = vmatmul.mubr.f32.gmra.mxu0 %v239
  %v496 = vpop.f32.mrf.mxu0
  %v497 = vadd.f32 %v298, %v496
  %v498 = vpop.f32.mrf.mxu0
  %499 = vmatprep.mubr.f32.mxu0 0.0
  %500 = vmatmul.mubr.f32.gmra.mxu0 %v240
  %v501 = vpop.f32.mrf.mxu0
  %v502 = vadd.f32 %v298, %v501
  %v503 = vpop.f32.mrf.mxu0
  %504 = vmatprep.mubr.f32.mxu0 0.0
  %505 = vmatmul.mubr.f32.gmra.mxu0 %v241
  %v506 = vpop.f32.mrf.mxu0
  %v507 = vadd.f32 %v298, %v506
  %v508 = vpop.f32.mrf.mxu0
  %509 = vmatprep.mubr.f32.mxu0 0.0
  %510 = vmatmul.mubr.f32.gmra.mxu0 %v242
  %v511 = vpop.f32.mrf.mxu0
  %v512 = vadd.f32 %v298, %v511
  %v513 = vpop.f32.mrf.mxu0
  %514 = vmatprep.mubr.f32.mxu0 0.0
  %515 = vmatmul.mubr.f32.gmra.mxu0 %v243
  %v516 = vpop.f32.mrf.mxu0
  %v517 = vadd.f32 %v298, %v516
  %v518 = vpop.f32.mrf.mxu0
  %519 = vmatprep.mubr.f32.mxu0 0.0
  %520 = vmatmul.mubr.f32.gmra.mxu0 %v244
  %v521 = vpop.f32.mrf.mxu0
  %v522 = vadd.f32 %v298, %v521
  %v523 = vpop.f32.mrf.mxu0
  %524 = vmatprep.mubr.f32.mxu0 0.0
  %525 = vmatmul.mubr.f32.gmra.mxu0 %v245
  %v526 = vpop.f32.mrf.mxu0
  %v527 = vadd.f32 %v298, %v526
  %v528 = vpop.f32.mrf.mxu0
  %529 = vmatprep.mubr.f32.mxu0 0.0
  %530 = vmatmul.mubr.f32.gmra.mxu0 %v246
  %v531 = vpop.f32.mrf.mxu0
  %v532 = vadd.f32 %v298, %v531
  %v533 = vpop.f32.mrf.mxu0
  %534 = vmatprep.mubr.f32.mxu0 0.0
  %535 = vmatmul.mubr.f32.gmra.mxu0 %v247
  %v536 = vpop.f32.mrf.mxu0
  %v537 = vadd.f32 %v298, %v536
  %v538 = vpop.f32.mrf.mxu0
  %539 = vmatprep.mubr.f32.mxu0 0.0
  %540 = vmatmul.mubr.f32.gmra.mxu0 %v248
  %v541 = vpop.f32.mrf.mxu0
  %v542 = vadd.f32 %v298, %v541
  %v543 = vpop.f32.mrf.mxu0
  %544 = vmatprep.mubr.f32.mxu0 0.0
  %545 = vmatmul.mubr.f32.gmra.mxu0 %v249
  %v546 = vpop.f32.mrf.mxu0
  %v547 = vadd.f32 %v298, %v546
  %v548 = vpop.f32.mrf.mxu0
  %549 = vmatprep.mubr.f32.mxu0 0.0
  %550 = vmatmul.mubr.f32.gmra.mxu0 %v250
  %v551 = vpop.f32.mrf.mxu0
  %v552 = vadd.f32 %v298, %v551
  %v553 = vpop.f32.mrf.mxu0
  %554 = vmatprep.mubr.f32.mxu0 0.0
  %555 = vmatmul.mubr.f32.gmra.mxu0 %v251
  %v556 = vpop.f32.mrf.mxu0
  %v557 = vadd.f32 %v298, %v556
  %v558 = vpop.f32.mrf.mxu0
  %559 = vmatprep.mubr.f32.mxu0 0.0
  %560 = vmatmul.mubr.f32.gmra.mxu0 %v252
  %v561 = vpop.f32.mrf.mxu0
  %v562 = vadd.f32 %v298, %v561
  %v563 = vpop.f32.mrf.mxu0
  %564 = vmatprep.mubr.f32.mxu0 0.0
  %565 = vmatmul.mubr.f32.gmra.mxu0 %v253
  %v566 = vpop.f32.mrf.mxu0
  %v567 = vadd.f32 %v298, %v566
  %v568 = vpop.f32.mrf.mxu0
  %569 = vmatprep.mubr.f32.mxu0 0.0
  %570 = vmatmul.mubr.f32.gmra.mxu0 %v254
  %v571 = vpop.f32.mrf.mxu0
  %v572 = vadd.f32 %v298, %v571
  %v573 = vpop.f32.mrf.mxu0
  %574 = vmatprep.mubr.f32.mxu0 0.0
  %575 = vmatmul.mubr.f32.gmra.mxu0 %v255
  %v576 = vpop.f32.mrf.mxu0
  %v577 = vadd.f32 %v298, %v576
  %v578 = vpop.f32.mrf.mxu0
  %579 = vmatprep.mubr.f32.mxu0 0.0
  %580 = vmatmul.mubr.f32.gmra.mxu0 %v256
  %v581 = vpop.f32.mrf.mxu0
  %v582 = vadd.f32 %v298, %v581
  %v583 = vpop.f32.mrf.mxu0
  %584 = vmatprep.mubr.f32.mxu0 0.0
  %585 = vmatmul.mubr.f32.gmra.mxu0 %v257
  %v586 = vpop.f32.mrf.mxu0
  %v587 = vadd.f32 %v298, %v586
  %v588 = vpop.f32.mrf.mxu0
  %589 = vmatprep.mubr.f32.mxu0 0.0
  %590 = vmatmul.mubr.f32.gmra.mxu0 %v258
  %v591 = vpop.f32.mrf.mxu0
  %v592 = vadd.f32 %v298, %v591
  %v593 = vpop.f32.mrf.mxu0
  %594 = vmatprep.mubr.f32.mxu0 0.0
  %595 = vmatmul.mubr.f32.gmra.mxu0 %v259
  %v596 = vpop.f32.mrf.mxu0
  %v597 = vadd.f32 %v298, %v596
  %v598 = vpop.f32.mrf.mxu0
  %599 = vmatprep.mubr.f32.mxu0 0.0
  %600 = vmatmul.mubr.f32.gmra.mxu0 %v260
  %v601 = vpop.f32.mrf.mxu0
  %v602 = vadd.f32 %v298, %v601
  %v603 = vpop.f32.mrf.mxu0
  %604 = vmatprep.mubr.f32.mxu0 0.0
  %605 = vmatmul.mubr.f32.gmra.mxu0 %v261
  %v606 = vpop.f32.mrf.mxu0
  %v607 = vadd.f32 %v298, %v606
  %v608 = vpop.f32.mrf.mxu0
  %609 = vmatprep.mubr.f32.mxu0 0.0
  %610 = vmatmul.mubr.f32.gmra.mxu0 %v262
  %v611 = vpop.f32.mrf.mxu0
  %v612 = vadd.f32 %v298, %v611
  %v613 = vpop.f32.mrf.mxu0
  %614 = vmatprep.mubr.f32.mxu0 0.0
  %615 = vmatmul.mubr.f32.gmra.mxu0 %v263
  %v616 = vpop.f32.mrf.mxu0
  %v617 = vadd.f32 %v298, %v616
  %v618 = vpop.f32.mrf.mxu0
  %619 = vmatprep.mubr.f32.mxu0 0.0
  %620 = vmatmul.mubr.f32.gmra.mxu0 %v264
  %v621 = vpop.f32.mrf.mxu0
  %v622 = vadd.f32 %v298, %v621
  %v623 = vpop.f32.mrf.mxu0
  %624 = vmatprep.mubr.f32.mxu0 0.0
  %625 = vmatmul.mubr.f32.gmra.mxu0 %v265
  %v626 = vpop.f32.mrf.mxu0
  %v627 = vadd.f32 %v298, %v626
  %v628 = vpop.f32.mrf.mxu0
  %629 = vmatprep.mubr.f32.mxu0 0.0
  %630 = vmatmul.mubr.f32.gmra.mxu0 %v266
  %v631 = vpop.f32.mrf.mxu0
  %v632 = vadd.f32 %v298, %v631
  %v633 = vpop.f32.mrf.mxu0
  %634 = vmatprep.mubr.f32.mxu0 0.0
  %635 = vmatmul.mubr.f32.gmra.mxu0 %v267
  %v636 = vpop.f32.mrf.mxu0
  %v637 = vadd.f32 %v298, %v636
  %v638 = vpop.f32.mrf.mxu0
  %639 = vmatprep.mubr.f32.mxu0 0.0
  %640 = vmatmul.mubr.f32.gmra.mxu0 %v268
  %v641 = vpop.f32.mrf.mxu0
  %v642 = vadd.f32 %v298, %v641
  %v643 = vpop.f32.mrf.mxu0
  %644 = vmatprep.mubr.f32.mxu0 0.0
  %645 = vmatmul.mubr.f32.gmra.mxu0 %v269
  %v646 = vpop.f32.mrf.mxu0
  %v647 = vadd.f32 %v298, %v646
  %v648 = vpop.f32.mrf.mxu0
  %649 = vmatprep.mubr.f32.mxu0 0.0
  %650 = vmatmul.mubr.f32.gmra.mxu0 %v270
  %v651 = vpop.f32.mrf.mxu0
  %v652 = vadd.f32 %v298, %v651
  %v653 = vpop.f32.mrf.mxu0
  %654 = vmatprep.mubr.f32.mxu0 0.0
  %655 = vmatmul.mubr.f32.gmra.mxu0 %v271
  %v656 = vpop.f32.mrf.mxu0
  %v657 = vadd.f32 %v298, %v656
  %v658 = vpop.f32.mrf.mxu0
  %659 = vmatprep.mubr.f32.mxu0 0.0
  %660 = vmatmul.mubr.f32.gmra.mxu0 %v272
  %v661 = vpop.f32.mrf.mxu0
  %v662 = vadd.f32 %v298, %v661
  %v663 = vpop.f32.mrf.mxu0
  %664 = vmatprep.mubr.f32.mxu0 0.0
  %665 = vmatmul.mubr.f32.gmra.mxu0 %v273
  %v666 = vpop.f32.mrf.mxu0
  %v667 = vadd.f32 %v298, %v666
  %v668 = vpop.f32.mrf.mxu0
  %669 = vmatprep.mubr.f32.mxu0 0.0
  %670 = vmatmul.mubr.f32.gmra.mxu0 %v274
  %v671 = vpop.f32.mrf.mxu0
  %v672 = vadd.f32 %v298, %v671
  %v673 = vpop.f32.mrf.mxu0
  %674 = vmatprep.mubr.f32.mxu0 0.0
  %675 = vmatmul.mubr.f32.gmra.mxu0 %v275
  %v676 = vpop.f32.mrf.mxu0
  %v677 = vadd.f32 %v298, %v676
  %v678 = vpop.f32.mrf.mxu0
  %679 = vmatprep.mubr.f32.mxu0 0.0
  %680 = vmatmul.mubr.f32.gmra.mxu0 %v276
  %v681 = vpop.f32.mrf.mxu0
  %v682 = vadd.f32 %v298, %v681
  %v683 = vpop.f32.mrf.mxu0
  %684 = vdwg.mxu0
  %v685 = vmax.f32 %v367, 0.0
  %v686 = vmax.f32 %v372, 0.0
  %v687 = vmax.f32 %v377, 0.0
  %v688 = vmax.f32 %v382, 0.0
  %v689 = vmax.f32 %v387, 0.0
  %v690 = vmax.f32 %v392, 0.0
  %v691 = vmax.f32 %v397, 0.0
  %v692 = vmax.f32 %v402, 0.0
  %v693 = vmax.f32 %v407, 0.0
  %v694 = vmax.f32 %v412, 0.0
  %v695 = vmax.f32 %v417, 0.0
  %v696 = vmax.f32 %v422, 0.0
  %v697 = vmax.f32 %v427, 0.0
  %v698 = vmax.f32 %v432, 0.0
  %v699 = vmax.f32 %v437, 0.0
  %v700 = vmax.f32 %v442, 0.0
  %v701 = vmax.f32 %v447, 0.0
  %v702 = vmax.f32 %v452, 0.0
  %v703 = vmax.f32 %v457, 0.0
  %v704 = vmax.f32 %v462, 0.0
  %v705 = vmax.f32 %v467, 0.0
  %v706 = vmax.f32 %v472, 0.0
  %v707 = vmax.f32 %v477, 0.0
  %v708 = vmax.f32 %v482, 0.0
  %v709 = vmax.f32 %v487, 0.0
  %v710 = vmax.f32 %v492, 0.0
  %v711 = vmax.f32 %v497, 0.0
  %v712 = vmax.f32 %v502, 0.0
  %v713 = vmax.f32 %v507, 0.0
  %v714 = vmax.f32 %v512, 0.0
  %v715 = vmax.f32 %v517, 0.0
  %v716 = vmax.f32 %v522, 0.0
  %v717 = vmax.f32 %v527, 0.0
  %v718 = vmax.f32 %v532, 0.0
  %v719 = vmax.f32 %v537, 0.0
  %v720 = vmax.f32 %v542, 0.0
  %v721 = vmax.f32 %v547, 0.0
  %v722 = vmax.f32 %v552, 0.0
  %v723 = vmax.f32 %v557, 0.0
  %v724 = vmax.f32 %v562, 0.0
  %v725 = vmax.f32 %v567, 0.0
  %v726 = vmax.f32 %v572, 0.0
  %v727 = vmax.f32 %v577, 0.0
  %v728 = vmax.f32 %v582, 0.0
  %v729 = vmax.f32 %v587, 0.0
  %v730 = vmax.f32 %v592, 0.0
  %v731 = vmax.f32 %v597, 0.0
  %v732 = vmax.f32 %v602, 0.0
  %v733 = vmax.f32 %v607, 0.0
  %v734 = vmax.f32 %v612, 0.0
  %v735 = vmax.f32 %v617, 0.0
  %v736 = vmax.f32 %v622, 0.0
  %v737 = vmax.f32 %v627, 0.0
  %v738 = vmax.f32 %v632, 0.0
  %v739 = vmax.f32 %v637, 0.0
  %v740 = vmax.f32 %v642, 0.0
  %v741 = vmax.f32 %v647, 0.0
  %v742 = vmax.f32 %v652, 0.0
  %v743 = vmax.f32 %v657, 0.0
  %v744 = vmax.f32 %v662, 0.0
  %v745 = vmax.f32 %v667, 0.0
  %v746 = vmax.f32 %v672, 0.0
  %v747 = vmax.f32 %v677, 0.0
  %v748 = vmax.f32 %v682, 0.0
  %v749 = vld [vmem:[%s3] sm:$0xff]
  %v750 = vld [vmem:[%s3 + $0x8] sm:$0xff]
  %v751 = vld [vmem:[%s3 + $0x10] sm:$0xff]
  %v752 = vld [vmem:[%s3 + $0x18] sm:$0xff]
  %v753 = vld [vmem:[%s3 + $0x20] sm:$0xff]
  %v754 = vld [vmem:[%s3 + $0x28] sm:$0xff]
  %v755 = vld [vmem:[%s3 + $0x30] sm:$0xff]
  %v756 = vld [vmem:[%s3 + $0x38] sm:$0xff]
  %v757 = vld [vmem:[%s3 + $0x40] sm:$0xff]
  %v758 = vld [vmem:[%s3 + $0x48] sm:$0xff]
  %v759 = vld [vmem:[%s3 + $0x50] sm:$0xff]
  %v760 = vld [vmem:[%s3 + $0x58] sm:$0xff]
  %v761 = vld [vmem:[%s3 + $0x60] sm:$0xff]
  %v762 = vld [vmem:[%s3 + $0x68] sm:$0xff]
  %v763 = vld [vmem:[%s3 + $0x70] sm:$0xff]
  %v764 = vld [vmem:[%s3 + $0x78] sm:$0xff]
  %v765 = vld [vmem:[%s4] sm:$0x1]
  %v767 = vlaneseq
  %v768 = vshrl.u32 %v767, 7
  %v769 = vsub.s32 0, %v768
  %v770 = vrot.slane %v765, %v769
  %772 = vmatprep.subr.mxu0 0.0
  %773 = vmatpush1.msra.mxu0 %v764
  %774 = vmatprep.subr.mxu0 0.0
  %775 = vmatpush1.msra.mxu0 %v763
  %776 = vmatprep.subr.mxu0 0.0
  %777 = vmatpush1.msra.mxu0 %v762
  %778 = vmatprep.subr.mxu0 0.0
  %779 = vmatpush1.msra.mxu0 %v761
  %780 = vmatprep.subr.mxu0 0.0
  %781 = vmatpush1.msra.mxu0 %v760
  %782 = vmatprep.subr.mxu0 0.0
  %783 = vmatpush1.msra.mxu0 %v759
  %784 = vmatprep.subr.mxu0 0.0
  %785 = vmatpush1.msra.mxu0 %v758
  %786 = vmatprep.subr.mxu0 0.0
  %787 = vmatpush1.msra.mxu0 %v757
  %788 = vmatprep.subr.mxu0 0.0
  %789 = vmatpush1.msra.mxu0 %v756
  %790 = vmatprep.subr.mxu0 0.0
  %791 = vmatpush1.msra.mxu0 %v755
  %792 = vmatprep.subr.mxu0 0.0
  %793 = vmatpush1.msra.mxu0 %v754
  %794 = vmatprep.subr.mxu0 0.0
  %795 = vmatpush1.msra.mxu0 %v753
  %796 = vmatprep.subr.mxu0 0.0
  %797 = vmatpush1.msra.mxu0 %v752
  %798 = vmatprep.subr.mxu0 0.0
  %799 = vmatpush1.msra.mxu0 %v751
  %800 = vmatprep.subr.mxu0 0.0
  %801 = vmatpush1.msra.mxu0 %v750
  %802 = vmatprep.subr.mxu0 0.0
  %803 = vmatpush1.msra.mxu0 %v749
  %804 = vmatprep.subr.mxu0 0.0
  %805 = vmatpush2.msra.mxu0 0.0
  %806 = vmatprep.subr.mxu0 0.0
  %807 = vmatpush2.msra.mxu0 0.0
  %808 = vmatprep.subr.mxu0 0.0
  %809 = vmatpush2.msra.mxu0 0.0
  %810 = vmatprep.subr.mxu0 0.0
  %811 = vmatpush2.msra.mxu0 0.0
  %812 = vmatprep.subr.mxu0 0.0
  %813 = vmatpush2.msra.mxu0 0.0
  %814 = vmatprep.subr.mxu0 0.0
  %815 = vmatpush2.msra.mxu0 0.0
  %816 = vmatprep.subr.mxu0 0.0
  %817 = vmatpush2.msra.mxu0 0.0
  %818 = vmatprep.subr.mxu0 0.0
  %819 = vmatpush2.msra.mxu0 0.0
  %820 = vmatprep.subr.mxu0 0.0
  %821 = vmatpush2.msra.mxu0 0.0
  %822 = vmatprep.subr.mxu0 0.0
  %823 = vmatpush2.msra.mxu0 0.0
  %824 = vmatprep.subr.mxu0 0.0
  %825 = vmatpush2.msra.mxu0 0.0
  %826 = vmatprep.subr.mxu0 0.0
  %827 = vmatpush2.msra.mxu0 0.0
  %828 = vmatprep.subr.mxu0 0.0
  %829 = vmatpush2.msra.mxu0 0.0
  %830 = vmatprep.subr.mxu0 0.0
  %831 = vmatpush2.msra.mxu0 0.0
  %832 = vmatprep.subr.mxu0 0.0
  %833 = vmatpush2.msra.mxu0 0.0
  %834 = vmatprep.subr.mxu0 0.0
  %835 = vmatpush2.msra.mxu0 0.0
  %836 = vmatprep.mubr.f32.mxu0 0.0
  %837 = vmatmul.mubr.f32.gmra.mxu0 %v685
  %v838 = vpop.f32.mrf.mxu0
  %v839 = vadd.f32 %v770, %v838
  %v840 = vpop.f32.mrf.mxu0
  %841 = vmatprep.mubr.f32.mxu0 0.0
  %842 = vmatmul.mubr.f32.gmra.mxu0 %v686
  %v843 = vpop.f32.mrf.mxu0
  %v844 = vadd.f32 %v770, %v843
  %v845 = vpop.f32.mrf.mxu0
  %846 = vmatprep.mubr.f32.mxu0 0.0
  %847 = vmatmul.mubr.f32.gmra.mxu0 %v687
  %v848 = vpop.f32.mrf.mxu0
  %v849 = vadd.f32 %v770, %v848
  %v850 = vpop.f32.mrf.mxu0
  %851 = vmatprep.mubr.f32.mxu0 0.0
  %852 = vmatmul.mubr.f32.gmra.mxu0 %v688
  %v853 = vpop.f32.mrf.mxu0
  %v854 = vadd.f32 %v770, %v853
  %v855 = vpop.f32.mrf.mxu0
  %856 = vmatprep.mubr.f32.mxu0 0.0
  %857 = vmatmul.mubr.f32.gmra.mxu0 %v689
  %v858 = vpop.f32.mrf.mxu0
  %v859 = vadd.f32 %v770, %v858
  %v860 = vpop.f32.mrf.mxu0
  %861 = vmatprep.mubr.f32.mxu0 0.0
  %862 = vmatmul.mubr.f32.gmra.mxu0 %v690
  %v863 = vpop.f32.mrf.mxu0
  %v864 = vadd.f32 %v770, %v863
  %v865 = vpop.f32.mrf.mxu0
  %866 = vmatprep.mubr.f32.mxu0 0.0
  %867 = vmatmul.mubr.f32.gmra.mxu0 %v691
  %v868 = vpop.f32.mrf.mxu0
  %v869 = vadd.f32 %v770, %v868
  %v870 = vpop.f32.mrf.mxu0
  %871 = vmatprep.mubr.f32.mxu0 0.0
  %872 = vmatmul.mubr.f32.gmra.mxu0 %v692
  %v873 = vpop.f32.mrf.mxu0
  %v874 = vadd.f32 %v770, %v873
  %v875 = vpop.f32.mrf.mxu0
  %876 = vmatprep.mubr.f32.mxu0 0.0
  %877 = vmatmul.mubr.f32.gmra.mxu0 %v693
  %v878 = vpop.f32.mrf.mxu0
  %v879 = vadd.f32 %v770, %v878
  %v880 = vpop.f32.mrf.mxu0
  %881 = vmatprep.mubr.f32.mxu0 0.0
  %882 = vmatmul.mubr.f32.gmra.mxu0 %v694
  %v883 = vpop.f32.mrf.mxu0
  %v884 = vadd.f32 %v770, %v883
  %v885 = vpop.f32.mrf.mxu0
  %886 = vmatprep.mubr.f32.mxu0 0.0
  %887 = vmatmul.mubr.f32.gmra.mxu0 %v695
  %v888 = vpop.f32.mrf.mxu0
  %v889 = vadd.f32 %v770, %v888
  %v890 = vpop.f32.mrf.mxu0
  %891 = vmatprep.mubr.f32.mxu0 0.0
  %892 = vmatmul.mubr.f32.gmra.mxu0 %v696
  %v893 = vpop.f32.mrf.mxu0
  %v894 = vadd.f32 %v770, %v893
  %v895 = vpop.f32.mrf.mxu0
  %896 = vmatprep.mubr.f32.mxu0 0.0
  %897 = vmatmul.mubr.f32.gmra.mxu0 %v697
  %v898 = vpop.f32.mrf.mxu0
  %v899 = vadd.f32 %v770, %v898
  %v900 = vpop.f32.mrf.mxu0
  %901 = vmatprep.mubr.f32.mxu0 0.0
  %902 = vmatmul.mubr.f32.gmra.mxu0 %v698
  %v903 = vpop.f32.mrf.mxu0
  %v904 = vadd.f32 %v770, %v903
  %v905 = vpop.f32.mrf.mxu0
  %906 = vmatprep.mubr.f32.mxu0 0.0
  %907 = vmatmul.mubr.f32.gmra.mxu0 %v699
  %v908 = vpop.f32.mrf.mxu0
  %v909 = vadd.f32 %v770, %v908
  %v910 = vpop.f32.mrf.mxu0
  %911 = vmatprep.mubr.f32.mxu0 0.0
  %912 = vmatmul.mubr.f32.gmra.mxu0 %v700
  %v913 = vpop.f32.mrf.mxu0
  %v914 = vadd.f32 %v770, %v913
  %v915 = vpop.f32.mrf.mxu0
  %916 = vmatprep.mubr.f32.mxu0 0.0
  %917 = vmatmul.mubr.f32.gmra.mxu0 %v701
  %v918 = vpop.f32.mrf.mxu0
  %v919 = vadd.f32 %v770, %v918
  %v920 = vpop.f32.mrf.mxu0
  %921 = vmatprep.mubr.f32.mxu0 0.0
  %922 = vmatmul.mubr.f32.gmra.mxu0 %v702
  %v923 = vpop.f32.mrf.mxu0
  %v924 = vadd.f32 %v770, %v923
  %v925 = vpop.f32.mrf.mxu0
  %926 = vmatprep.mubr.f32.mxu0 0.0
  %927 = vmatmul.mubr.f32.gmra.mxu0 %v703
  %v928 = vpop.f32.mrf.mxu0
  %v929 = vadd.f32 %v770, %v928
  %v930 = vpop.f32.mrf.mxu0
  %931 = vmatprep.mubr.f32.mxu0 0.0
  %932 = vmatmul.mubr.f32.gmra.mxu0 %v704
  %v933 = vpop.f32.mrf.mxu0
  %v934 = vadd.f32 %v770, %v933
  %v935 = vpop.f32.mrf.mxu0
  %936 = vmatprep.mubr.f32.mxu0 0.0
  %937 = vmatmul.mubr.f32.gmra.mxu0 %v705
  %v938 = vpop.f32.mrf.mxu0
  %v939 = vadd.f32 %v770, %v938
  %v940 = vpop.f32.mrf.mxu0
  %941 = vmatprep.mubr.f32.mxu0 0.0
  %942 = vmatmul.mubr.f32.gmra.mxu0 %v706
  %v943 = vpop.f32.mrf.mxu0
  %v944 = vadd.f32 %v770, %v943
  %v945 = vpop.f32.mrf.mxu0
  %946 = vmatprep.mubr.f32.mxu0 0.0
  %947 = vmatmul.mubr.f32.gmra.mxu0 %v707
  %v948 = vpop.f32.mrf.mxu0
  %v949 = vadd.f32 %v770, %v948
  %v950 = vpop.f32.mrf.mxu0
  %951 = vmatprep.mubr.f32.mxu0 0.0
  %952 = vmatmul.mubr.f32.gmra.mxu0 %v708
  %v953 = vpop.f32.mrf.mxu0
  %v954 = vadd.f32 %v770, %v953
  %v955 = vpop.f32.mrf.mxu0
  %956 = vmatprep.mubr.f32.mxu0 0.0
  %957 = vmatmul.mubr.f32.gmra.mxu0 %v709
  %v958 = vpop.f32.mrf.mxu0
  %v959 = vadd.f32 %v770, %v958
  %v960 = vpop.f32.mrf.mxu0
  %961 = vmatprep.mubr.f32.mxu0 0.0
  %962 = vmatmul.mubr.f32.gmra.mxu0 %v710
  %v963 = vpop.f32.mrf.mxu0
  %v964 = vadd.f32 %v770, %v963
  %v965 = vpop.f32.mrf.mxu0
  %966 = vmatprep.mubr.f32.mxu0 0.0
  %967 = vmatmul.mubr.f32.gmra.mxu0 %v711
  %v968 = vpop.f32.mrf.mxu0
  %v969 = vadd.f32 %v770, %v968
  %v970 = vpop.f32.mrf.mxu0
  %971 = vmatprep.mubr.f32.mxu0 0.0
  %972 = vmatmul.mubr.f32.gmra.mxu0 %v712
  %v973 = vpop.f32.mrf.mxu0
  %v974 = vadd.f32 %v770, %v973
  %v975 = vpop.f32.mrf.mxu0
  %976 = vmatprep.mubr.f32.mxu0 0.0
  %977 = vmatmul.mubr.f32.gmra.mxu0 %v713
  %v978 = vpop.f32.mrf.mxu0
  %v979 = vadd.f32 %v770, %v978
  %v980 = vpop.f32.mrf.mxu0
  %981 = vmatprep.mubr.f32.mxu0 0.0
  %982 = vmatmul.mubr.f32.gmra.mxu0 %v714
  %v983 = vpop.f32.mrf.mxu0
  %v984 = vadd.f32 %v770, %v983
  %v985 = vpop.f32.mrf.mxu0
  %986 = vmatprep.mubr.f32.mxu0 0.0
  %987 = vmatmul.mubr.f32.gmra.mxu0 %v715
  %v988 = vpop.f32.mrf.mxu0
  %v989 = vadd.f32 %v770, %v988
  %v990 = vpop.f32.mrf.mxu0
  %991 = vmatprep.mubr.f32.mxu0 0.0
  %992 = vmatmul.mubr.f32.gmra.mxu0 %v716
  %v993 = vpop.f32.mrf.mxu0
  %v994 = vadd.f32 %v770, %v993
  %v995 = vpop.f32.mrf.mxu0
  %996 = vmatprep.mubr.f32.mxu0 0.0
  %997 = vmatmul.mubr.f32.gmra.mxu0 %v717
  %v998 = vpop.f32.mrf.mxu0
  %v999 = vadd.f32 %v770, %v998
  %v1000 = vpop.f32.mrf.mxu0
  %1001 = vmatprep.mubr.f32.mxu0 0.0
  %1002 = vmatmul.mubr.f32.gmra.mxu0 %v718
  %v1003 = vpop.f32.mrf.mxu0
  %v1004 = vadd.f32 %v770, %v1003
  %v1005 = vpop.f32.mrf.mxu0
  %1006 = vmatprep.mubr.f32.mxu0 0.0
  %1007 = vmatmul.mubr.f32.gmra.mxu0 %v719
  %v1008 = vpop.f32.mrf.mxu0
  %v1009 = vadd.f32 %v770, %v1008
  %v1010 = vpop.f32.mrf.mxu0
  %1011 = vmatprep.mubr.f32.mxu0 0.0
  %1012 = vmatmul.mubr.f32.gmra.mxu0 %v720
  %v1013 = vpop.f32.mrf.mxu0
  %v1014 = vadd.f32 %v770, %v1013
  %v1015 = vpop.f32.mrf.mxu0
  %1016 = vmatprep.mubr.f32.mxu0 0.0
  %1017 = vmatmul.mubr.f32.gmra.mxu0 %v721
  %v1018 = vpop.f32.mrf.mxu0
  %v1019 = vadd.f32 %v770, %v1018
  %v1020 = vpop.f32.mrf.mxu0
  %1021 = vmatprep.mubr.f32.mxu0 0.0
  %1022 = vmatmul.mubr.f32.gmra.mxu0 %v722
  %v1023 = vpop.f32.mrf.mxu0
  %v1024 = vadd.f32 %v770, %v1023
  %v1025 = vpop.f32.mrf.mxu0
  %1026 = vmatprep.mubr.f32.mxu0 0.0
  %1027 = vmatmul.mubr.f32.gmra.mxu0 %v723
  %v1028 = vpop.f32.mrf.mxu0
  %v1029 = vadd.f32 %v770, %v1028
  %v1030 = vpop.f32.mrf.mxu0
  %1031 = vmatprep.mubr.f32.mxu0 0.0
  %1032 = vmatmul.mubr.f32.gmra.mxu0 %v724
  %v1033 = vpop.f32.mrf.mxu0
  %v1034 = vadd.f32 %v770, %v1033
  %v1035 = vpop.f32.mrf.mxu0
  %1036 = vmatprep.mubr.f32.mxu0 0.0
  %1037 = vmatmul.mubr.f32.gmra.mxu0 %v725
  %v1038 = vpop.f32.mrf.mxu0
  %v1039 = vadd.f32 %v770, %v1038
  %v1040 = vpop.f32.mrf.mxu0
  %1041 = vmatprep.mubr.f32.mxu0 0.0
  %1042 = vmatmul.mubr.f32.gmra.mxu0 %v726
  %v1043 = vpop.f32.mrf.mxu0
  %v1044 = vadd.f32 %v770, %v1043
  %v1045 = vpop.f32.mrf.mxu0
  %1046 = vmatprep.mubr.f32.mxu0 0.0
  %1047 = vmatmul.mubr.f32.gmra.mxu0 %v727
  %v1048 = vpop.f32.mrf.mxu0
  %v1049 = vadd.f32 %v770, %v1048
  %v1050 = vpop.f32.mrf.mxu0
  %1051 = vmatprep.mubr.f32.mxu0 0.0
  %1052 = vmatmul.mubr.f32.gmra.mxu0 %v728
  %v1053 = vpop.f32.mrf.mxu0
  %v1054 = vadd.f32 %v770, %v1053
  %v1055 = vpop.f32.mrf.mxu0
  %1056 = vmatprep.mubr.f32.mxu0 0.0
  %1057 = vmatmul.mubr.f32.gmra.mxu0 %v729
  %v1058 = vpop.f32.mrf.mxu0
  %v1059 = vadd.f32 %v770, %v1058
  %v1060 = vpop.f32.mrf.mxu0
  %1061 = vmatprep.mubr.f32.mxu0 0.0
  %1062 = vmatmul.mubr.f32.gmra.mxu0 %v730
  %v1063 = vpop.f32.mrf.mxu0
  %v1064 = vadd.f32 %v770, %v1063
  %v1065 = vpop.f32.mrf.mxu0
  %1066 = vmatprep.mubr.f32.mxu0 0.0
  %1067 = vmatmul.mubr.f32.gmra.mxu0 %v731
  %v1068 = vpop.f32.mrf.mxu0
  %v1069 = vadd.f32 %v770, %v1068
  %v1070 = vpop.f32.mrf.mxu0
  %1071 = vmatprep.mubr.f32.mxu0 0.0
  %1072 = vmatmul.mubr.f32.gmra.mxu0 %v732
  %v1073 = vpop.f32.mrf.mxu0
  %v1074 = vadd.f32 %v770, %v1073
  %v1075 = vpop.f32.mrf.mxu0
  %1076 = vmatprep.mubr.f32.mxu0 0.0
  %1077 = vmatmul.mubr.f32.gmra.mxu0 %v733
  %v1078 = vpop.f32.mrf.mxu0
  %v1079 = vadd.f32 %v770, %v1078
  %v1080 = vpop.f32.mrf.mxu0
  %1081 = vmatprep.mubr.f32.mxu0 0.0
  %1082 = vmatmul.mubr.f32.gmra.mxu0 %v734
  %v1083 = vpop.f32.mrf.mxu0
  %v1084 = vadd.f32 %v770, %v1083
  %v1085 = vpop.f32.mrf.mxu0
  %1086 = vmatprep.mubr.f32.mxu0 0.0
  %1087 = vmatmul.mubr.f32.gmra.mxu0 %v735
  %v1088 = vpop.f32.mrf.mxu0
  %v1089 = vadd.f32 %v770, %v1088
  %v1090 = vpop.f32.mrf.mxu0
  %1091 = vmatprep.mubr.f32.mxu0 0.0
  %1092 = vmatmul.mubr.f32.gmra.mxu0 %v736
  %v1093 = vpop.f32.mrf.mxu0
  %v1094 = vadd.f32 %v770, %v1093
  %v1095 = vpop.f32.mrf.mxu0
  %1096 = vmatprep.mubr.f32.mxu0 0.0
  %1097 = vmatmul.mubr.f32.gmra.mxu0 %v737
  %v1098 = vpop.f32.mrf.mxu0
  %v1099 = vadd.f32 %v770, %v1098
  %v1100 = vpop.f32.mrf.mxu0
  %1101 = vmatprep.mubr.f32.mxu0 0.0
  %1102 = vmatmul.mubr.f32.gmra.mxu0 %v738
  %v1103 = vpop.f32.mrf.mxu0
  %v1104 = vadd.f32 %v770, %v1103
  %v1105 = vpop.f32.mrf.mxu0
  %1106 = vmatprep.mubr.f32.mxu0 0.0
  %1107 = vmatmul.mubr.f32.gmra.mxu0 %v739
  %v1108 = vpop.f32.mrf.mxu0
  %v1109 = vadd.f32 %v770, %v1108
  %v1110 = vpop.f32.mrf.mxu0
  %1111 = vmatprep.mubr.f32.mxu0 0.0
  %1112 = vmatmul.mubr.f32.gmra.mxu0 %v740
  %v1113 = vpop.f32.mrf.mxu0
  %v1114 = vadd.f32 %v770, %v1113
  %v1115 = vpop.f32.mrf.mxu0
  %1116 = vmatprep.mubr.f32.mxu0 0.0
  %1117 = vmatmul.mubr.f32.gmra.mxu0 %v741
  %v1118 = vpop.f32.mrf.mxu0
  %v1119 = vadd.f32 %v770, %v1118
  %v1120 = vpop.f32.mrf.mxu0
  %1121 = vmatprep.mubr.f32.mxu0 0.0
  %1122 = vmatmul.mubr.f32.gmra.mxu0 %v742
  %v1123 = vpop.f32.mrf.mxu0
  %v1124 = vadd.f32 %v770, %v1123
  %v1125 = vpop.f32.mrf.mxu0
  %1126 = vmatprep.mubr.f32.mxu0 0.0
  %1127 = vmatmul.mubr.f32.gmra.mxu0 %v743
  %v1128 = vpop.f32.mrf.mxu0
  %v1129 = vadd.f32 %v770, %v1128
  %v1130 = vpop.f32.mrf.mxu0
  %1131 = vmatprep.mubr.f32.mxu0 0.0
  %1132 = vmatmul.mubr.f32.gmra.mxu0 %v744
  %v1133 = vpop.f32.mrf.mxu0
  %v1134 = vadd.f32 %v770, %v1133
  %v1135 = vpop.f32.mrf.mxu0
  %1136 = vmatprep.mubr.f32.mxu0 0.0
  %1137 = vmatmul.mubr.f32.gmra.mxu0 %v745
  %v1138 = vpop.f32.mrf.mxu0
  %v1139 = vadd.f32 %v770, %v1138
  %v1140 = vpop.f32.mrf.mxu0
  %1141 = vmatprep.mubr.f32.mxu0 0.0
  %1142 = vmatmul.mubr.f32.gmra.mxu0 %v746
  %v1143 = vpop.f32.mrf.mxu0
  %v1144 = vadd.f32 %v770, %v1143
  %v1145 = vpop.f32.mrf.mxu0
  %1146 = vmatprep.mubr.f32.mxu0 0.0
  %1147 = vmatmul.mubr.f32.gmra.mxu0 %v747
  %v1148 = vpop.f32.mrf.mxu0
  %v1149 = vadd.f32 %v770, %v1148
  %v1150 = vpop.f32.mrf.mxu0
  %1151 = vmatprep.mubr.f32.mxu0 0.0
  %1152 = vmatmul.mubr.f32.gmra.mxu0 %v748
  %v1153 = vpop.f32.mrf.mxu0
  %v1154 = vadd.f32 %v770, %v1153
  %v1155 = vpop.f32.mrf.mxu0
  %1156 = vdwg.mxu0
  %vm1157 = vcmask 23552
  %1158 = vst.msk [vmem:[%s5] sm:$0xff] %vm1157, %v839
  %1159 = vst.msk [vmem:[%s5 + $0x8] sm:$0xff] %vm1157, %v844
  %1160 = vst.msk [vmem:[%s5 + $0x10] sm:$0xff] %vm1157, %v849
  %1161 = vst.msk [vmem:[%s5 + $0x18] sm:$0xff] %vm1157, %v854
  %1162 = vst.msk [vmem:[%s5 + $0x20] sm:$0xff] %vm1157, %v859
  %1163 = vst.msk [vmem:[%s5 + $0x28] sm:$0xff] %vm1157, %v864
  %1164 = vst.msk [vmem:[%s5 + $0x30] sm:$0xff] %vm1157, %v869
  %1165 = vst.msk [vmem:[%s5 + $0x38] sm:$0xff] %vm1157, %v874
  %1166 = vst.msk [vmem:[%s5 + $0x40] sm:$0xff] %vm1157, %v879
  %1167 = vst.msk [vmem:[%s5 + $0x48] sm:$0xff] %vm1157, %v884
  %1168 = vst.msk [vmem:[%s5 + $0x50] sm:$0xff] %vm1157, %v889
  %1169 = vst.msk [vmem:[%s5 + $0x58] sm:$0xff] %vm1157, %v894
  %1170 = vst.msk [vmem:[%s5 + $0x60] sm:$0xff] %vm1157, %v899
  %1171 = vst.msk [vmem:[%s5 + $0x68] sm:$0xff] %vm1157, %v904
  %1172 = vst.msk [vmem:[%s5 + $0x70] sm:$0xff] %vm1157, %v909
  %1173 = vst.msk [vmem:[%s5 + $0x78] sm:$0xff] %vm1157, %v914
  %1174 = vst.msk [vmem:[%s5 + $0x80] sm:$0xff] %vm1157, %v919
  %1175 = vst.msk [vmem:[%s5 + $0x88] sm:$0xff] %vm1157, %v924
  %1176 = vst.msk [vmem:[%s5 + $0x90] sm:$0xff] %vm1157, %v929
  %1177 = vst.msk [vmem:[%s5 + $0x98] sm:$0xff] %vm1157, %v934
  %1178 = vst.msk [vmem:[%s5 + $0xa0] sm:$0xff] %vm1157, %v939
  %1179 = vst.msk [vmem:[%s5 + $0xa8] sm:$0xff] %vm1157, %v944
  %1180 = vst.msk [vmem:[%s5 + $0xb0] sm:$0xff] %vm1157, %v949
  %1181 = vst.msk [vmem:[%s5 + $0xb8] sm:$0xff] %vm1157, %v954
  %1182 = vst.msk [vmem:[%s5 + $0xc0] sm:$0xff] %vm1157, %v959
  %1183 = vst.msk [vmem:[%s5 + $0xc8] sm:$0xff] %vm1157, %v964
  %1184 = vst.msk [vmem:[%s5 + $0xd0] sm:$0xff] %vm1157, %v969
  %1185 = vst.msk [vmem:[%s5 + $0xd8] sm:$0xff] %vm1157, %v974
  %1186 = vst.msk [vmem:[%s5 + $0xe0] sm:$0xff] %vm1157, %v979
  %1187 = vst.msk [vmem:[%s5 + $0xe8] sm:$0xff] %vm1157, %v984
  %1188 = vst.msk [vmem:[%s5 + $0xf0] sm:$0xff] %vm1157, %v989
  %1189 = vst.msk [vmem:[%s5 + $0xf8] sm:$0xff] %vm1157, %v994
  %1190 = vst.msk [vmem:[%s5 + $0x100] sm:$0xff] %vm1157, %v999
  %1191 = vst.msk [vmem:[%s5 + $0x108] sm:$0xff] %vm1157, %v1004
  %1192 = vst.msk [vmem:[%s5 + $0x110] sm:$0xff] %vm1157, %v1009
  %1193 = vst.msk [vmem:[%s5 + $0x118] sm:$0xff] %vm1157, %v1014
  %1194 = vst.msk [vmem:[%s5 + $0x120] sm:$0xff] %vm1157, %v1019
  %1195 = vst.msk [vmem:[%s5 + $0x128] sm:$0xff] %vm1157, %v1024
  %1196 = vst.msk [vmem:[%s5 + $0x130] sm:$0xff] %vm1157, %v1029
  %1197 = vst.msk [vmem:[%s5 + $0x138] sm:$0xff] %vm1157, %v1034
  %1198 = vst.msk [vmem:[%s5 + $0x140] sm:$0xff] %vm1157, %v1039
  %1199 = vst.msk [vmem:[%s5 + $0x148] sm:$0xff] %vm1157, %v1044
  %1200 = vst.msk [vmem:[%s5 + $0x150] sm:$0xff] %vm1157, %v1049
  %1201 = vst.msk [vmem:[%s5 + $0x158] sm:$0xff] %vm1157, %v1054
  %1202 = vst.msk [vmem:[%s5 + $0x160] sm:$0xff] %vm1157, %v1059
  %1203 = vst.msk [vmem:[%s5 + $0x168] sm:$0xff] %vm1157, %v1064
  %1204 = vst.msk [vmem:[%s5 + $0x170] sm:$0xff] %vm1157, %v1069
  %1205 = vst.msk [vmem:[%s5 + $0x178] sm:$0xff] %vm1157, %v1074
  %1206 = vst.msk [vmem:[%s5 + $0x180] sm:$0xff] %vm1157, %v1079
  %1207 = vst.msk [vmem:[%s5 + $0x188] sm:$0xff] %vm1157, %v1084
  %1208 = vst.msk [vmem:[%s5 + $0x190] sm:$0xff] %vm1157, %v1089
  %1209 = vst.msk [vmem:[%s5 + $0x198] sm:$0xff] %vm1157, %v1094
  %1210 = vst.msk [vmem:[%s5 + $0x1a0] sm:$0xff] %vm1157, %v1099
  %1211 = vst.msk [vmem:[%s5 + $0x1a8] sm:$0xff] %vm1157, %v1104
  %1212 = vst.msk [vmem:[%s5 + $0x1b0] sm:$0xff] %vm1157, %v1109
  %1213 = vst.msk [vmem:[%s5 + $0x1b8] sm:$0xff] %vm1157, %v1114
  %1214 = vst.msk [vmem:[%s5 + $0x1c0] sm:$0xff] %vm1157, %v1119
  %1215 = vst.msk [vmem:[%s5 + $0x1c8] sm:$0xff] %vm1157, %v1124
  %1216 = vst.msk [vmem:[%s5 + $0x1d0] sm:$0xff] %vm1157, %v1129
  %1217 = vst.msk [vmem:[%s5 + $0x1d8] sm:$0xff] %vm1157, %v1134
  %1218 = vst.msk [vmem:[%s5 + $0x1e0] sm:$0xff] %vm1157, %v1139
  %1219 = vst.msk [vmem:[%s5 + $0x1e8] sm:$0xff] %vm1157, %v1144
  %1220 = vst.msk [vmem:[%s5 + $0x1f0] sm:$0xff] %vm1157, %v1149
  %1221 = vst.msk [vmem:[%s5 + $0x1f8] sm:$0xff] %vm1157, %v1154
  // Predicated region
  $region22: #{neural_network_forward.1} parent=0 // pred_check
    _
  $region23: #{neural_network_forward.1} parent=0 // pred_check_branch
    %1223 = sbr.rel (0) target = $region25
  $region24: #{neural_network_forward.1} parent=0 // pred_region
    _
  $region25: #{neural_network_forward.1} parent=0 // pred_fallthru
    _
  // Predicated region
  $region26: #{neural_network_forward.1} parent=0 // pred_check
    _
  $region27: #{neural_network_forward.1} parent=0 // pred_check_branch
    %1225 = sbr.rel (0) target = $region29
  $region28: #{neural_network_forward.1} parent=0 // pred_region
    _
  $region29: #{neural_network_forward.1} parent=0 // pred_fallthru
    _

</llo_original>
